<compile_context>
chip_gen: v7x
topology: tpu7x:2x2x1
jax: 0.10.0
libtpu: 0.0.40
codegen_flags: <defaults>
</compile_context>

<pallas_src>
import functools
import math

import jax
import jax.numpy as jnp
from jax.experimental import pallas as pl
from jax.experimental.pallas import tpu as pltpu

_VMEM_LIMIT = 48 * 1024 * 1024


def _pick_tile(m, target=256):
    """Largest multiple-of-8 divisor of m that is <= target (or m itself)."""
    if m <= target:
        return m
    for t in range(target, 7, -8):
        if m % t == 0:
            return t
    return m


# --------------------- kernel 1: conv1D + q/k/v/e + score vectors ---------------------

def _conv_qkv_score_kernel(x_ref, xp_ref, ent_ref,
                           wc0_ref, wc1_ref, bc_ref,
                           wq_ref, bq_ref, wk_ref, bk_ref, wv_ref, bv_ref,
                           we_ref, be_ref,
                           wsqq_ref, wsqe_ref, wskq_ref, wske_ref, wse_ref,
                           v_ref, e_ref, a_ref, kv_ref, ep_ref):
    f32 = jnp.float32
    x = x_ref[...]
    xp = xp_ref[...]
    ent = ent_ref[...]
    # conv1D (k=2, stride=1, pad=1, sliced to T): new_q[t] = x[t-1]@Wc0 + x[t]@Wc1 + b
    new_q = (jnp.dot(xp, wc0_ref[...], preferred_element_type=f32)
             + jnp.dot(x, wc1_ref[...], preferred_element_type=f32)
             + bc_ref[...])
    q = jnp.dot(new_q, wq_ref[...], preferred_element_type=f32) + bq_ref[...]
    k = jnp.dot(new_q, wk_ref[...], preferred_element_type=f32) + bk_ref[...]
    v = jnp.dot(new_q, wv_ref[...], preferred_element_type=f32) + bv_ref[...]
    e = jnp.dot(ent, we_ref[...], preferred_element_type=f32) + be_ref[...]
    v_ref[...] = v
    e_ref[...] = e
    # Per-(token, head) rank-1 GAT score contributions, on the MXU:
    #   A = [q|e] . w_qe,   Kv = [k|e] . w_ke,   Ep = entity . w_edge
    a_ref[...] = (jnp.dot(q, wsqq_ref[...], preferred_element_type=f32)
                  + jnp.dot(e, wsqe_ref[...], preferred_element_type=f32))
    kv_ref[...] = (jnp.dot(k, wskq_ref[...], preferred_element_type=f32)
                   + jnp.dot(e, wske_ref[...], preferred_element_type=f32))
    ep_ref[...] = jnp.dot(ent, wse_ref[...], preferred_element_type=f32)


def conv_qkv_score(x, xp, ent, wc0, wc1, bc, wq, bq, wk, bk, wv, bv, we, be,
                   wsqq, wsqe, wskq, wske, wse):
    M, E = x.shape
    E2 = wq.shape[1]
    H = wse.shape[1]
    tm = _pick_tile(M)
    row = lambda i: (i, 0)
    rep = lambda i: (0, 0)
    return pl.pallas_call(
        _conv_qkv_score_kernel,
        out_shape=(jax.ShapeDtypeStruct((M, E2), jnp.float32),
                   jax.ShapeDtypeStruct((M, E2), jnp.float32),
                   jax.ShapeDtypeStruct((M, H), jnp.float32),
                   jax.ShapeDtypeStruct((M, H), jnp.float32),
                   jax.ShapeDtypeStruct((M, H), jnp.float32)),
        grid=(M // tm,),
        in_specs=[pl.BlockSpec((tm, E), row),
                  pl.BlockSpec((tm, E), row),
                  pl.BlockSpec((tm, E), row),
                  pl.BlockSpec((E, E), rep), pl.BlockSpec((E, E), rep),
                  pl.BlockSpec((1, E), rep),
                  pl.BlockSpec((E, E2), rep), pl.BlockSpec((1, E2), rep),
                  pl.BlockSpec((E, E2), rep), pl.BlockSpec((1, E2), rep),
                  pl.BlockSpec((E, E2), rep), pl.BlockSpec((1, E2), rep),
                  pl.BlockSpec((E, E2), rep), pl.BlockSpec((1, E2), rep),
                  pl.BlockSpec((E2, H), rep), pl.BlockSpec((E2, H), rep),
                  pl.BlockSpec((E2, H), rep), pl.BlockSpec((E2, H), rep),
                  pl.BlockSpec((E, H), rep)],
        out_specs=(pl.BlockSpec((tm, E2), row), pl.BlockSpec((tm, E2), row),
                   pl.BlockSpec((tm, H), row), pl.BlockSpec((tm, H), row),
                   pl.BlockSpec((tm, H), row)),
        compiler_params=pltpu.CompilerParams(
            dimension_semantics=("parallel",),
            vmem_limit_bytes=_VMEM_LIMIT),
    )(x, xp, ent, wc0, wc1, bc, wq, bq, wk, bk, wv, bv, we, be,
      wsqq, wsqe, wskq, wske, wse)


# --------------------- kernel 2: GAT attention (leaky_relu/mask/softmax/PV) ---------------------

def _gat_attn_kernel(num_heads, s_ref, m_ref, ve_ref, o_ref):
    pad = m_ref[0] > 0                                   # (1, T), True == padded key
    for h in range(num_heads):                           # static python loop over heads
        s = s_ref[0, h]                                  # (T, T) precomputed raw score
        s = jnp.where(s > 0, s, 0.01 * s)                # leaky_relu(0.01)
        s = jnp.where(pad, -jnp.inf, s)                  # key-padding mask
        s_max = jnp.max(s, axis=-1, keepdims=True)
        p = jnp.exp(s - s_max)
        denom = jnp.sum(p, axis=-1, keepdims=True)
        p = p * pl.reciprocal(denom, approx=True)        # softmax normalize (EUP)
        o_ref[0, h] = jnp.dot(p, ve_ref[0, h], preferred_element_type=jnp.float32)


def gat_attention(scores, mask, ve, num_heads):
    B, H, T, _ = scores.shape
    Hd = ve.shape[-1]
    return pl.pallas_call(
        functools.partial(_gat_attn_kernel, num_heads),
        out_shape=jax.ShapeDtypeStruct((B, H, T, Hd), jnp.float32),
        grid=(B,),
        in_specs=[pl.BlockSpec((1, H, T, T), lambda b: (b, 0, 0, 0)),
                  pl.BlockSpec((1, 1, T), lambda b: (b, 0, 0)),
                  pl.BlockSpec((1, H, T, Hd), lambda b: (b, 0, 0, 0))],
        out_specs=pl.BlockSpec((1, H, T, Hd), lambda b: (b, 0, 0, 0)),
        compiler_params=pltpu.CompilerParams(
            dimension_semantics=("parallel",),
            vmem_limit_bytes=_VMEM_LIMIT),
    )(scores, mask, ve)


# --------------------- kernel 3: deconv1D + out_proj + residual + LayerNorm1 ---------------------

def _deconv_out_ln_kernel(a_ref, ap_ref, r_ref,
                          wd0_ref, wd1_ref, bd_ref, wo_ref, bo_ref,
                          g_ref, b_ref, o_ref):
    f32 = jnp.float32
    # deconv1D (k=2, stride=1, sliced to T): d[t] = a[t]@Wd0 + a[t-1]@Wd1 + b
    d = (jnp.dot(a_ref[...], wd0_ref[...], preferred_element_type=f32)
         + jnp.dot(ap_ref[...], wd1_ref[...], preferred_element_type=f32)
         + bd_ref[...])
    h = r_ref[...] + jnp.dot(d, wo_ref[...], preferred_element_type=f32) + bo_ref[...]
    mu = jnp.mean(h, axis=-1, keepdims=True)
    var = jnp.mean((h - mu) ** 2, axis=-1, keepdims=True)
    o_ref[...] = (h - mu) * jax.lax.rsqrt(var + 1e-5) * g_ref[...] + b_ref[...]


def deconv_out_ln(a, ap, resid, wd0, wd1, bd, wo, bo, gamma, beta):
    M, E = a.shape
    tm = _pick_tile(M)
    row = lambda i: (i, 0)
    rep = lambda i: (0, 0)
    return pl.pallas_call(
        _deconv_out_ln_kernel,
        out_shape=jax.ShapeDtypeStruct((M, E), jnp.float32),
        grid=(M // tm,),
        in_specs=[pl.BlockSpec((tm, E), row), pl.BlockSpec((tm, E), row),
                  pl.BlockSpec((tm, E), row),
                  pl.BlockSpec((E, E), rep), pl.BlockSpec((E, E), rep),
                  pl.BlockSpec((1, E), rep),
                  pl.BlockSpec((E, E), rep), pl.BlockSpec((1, E), rep),
                  pl.BlockSpec((1, E), rep), pl.BlockSpec((1, E), rep)],
        out_specs=pl.BlockSpec((tm, E), row),
        compiler_params=pltpu.CompilerParams(
            dimension_semantics=("parallel",),
            vmem_limit_bytes=_VMEM_LIMIT),
    )(a, ap, resid, wd0, wd1, bd, wo, bo, gamma, beta)


# --------------------- kernel 4: FFN (fc1 -> gelu -> fc2) + residual + LayerNorm2 ---------------------

def _ffn_ln_kernel(h_ref, w1_ref, b1_ref, w2_ref, b2_ref, g_ref, b_ref, o_ref):
    f32 = jnp.float32
    hin = h_ref[...]
    z = jnp.dot(hin, w1_ref[...], preferred_element_type=f32) + b1_ref[...]
    z = 0.5 * z * (1.0 + jax.lax.erf(z * (1.0 / math.sqrt(2.0))))   # exact gelu
    h = hin + jnp.dot(z, w2_ref[...], preferred_element_type=f32) + b2_ref[...]
    mu = jnp.mean(h, axis=-1, keepdims=True)
    var = jnp.mean((h - mu) ** 2, axis=-1, keepdims=True)
    o_ref[...] = (h - mu) * jax.lax.rsqrt(var + 1e-5) * g_ref[...] + b_ref[...]


def ffn_ln(h, w1, b1, w2, b2, gamma, beta):
    M, E = h.shape
    F_ = w1.shape[1]
    tm = _pick_tile(M)
    row = lambda i: (i, 0)
    rep = lambda i: (0, 0)
    return pl.pallas_call(
        _ffn_ln_kernel,
        out_shape=jax.ShapeDtypeStruct((M, E), jnp.float32),
        grid=(M // tm,),
        in_specs=[pl.BlockSpec((tm, E), row),
                  pl.BlockSpec((E, F_), rep), pl.BlockSpec((1, F_), rep),
                  pl.BlockSpec((F_, E), rep), pl.BlockSpec((1, E), rep),
                  pl.BlockSpec((1, E), rep), pl.BlockSpec((1, E), rep)],
        out_specs=pl.BlockSpec((tm, E), row),
        compiler_params=pltpu.CompilerParams(
            dimension_semantics=("parallel",),
            vmem_limit_bytes=_VMEM_LIMIT),
    )(h, w1, b1, w2, b2, gamma, beta)


# ---------------------------- parameters ----------------------------

def init_params(key, E, H, F_):
    Hd = E // H
    ks = jax.random.split(key, 20)

    def w(k, shape, scale=0.05):
        return scale * jax.random.normal(k, shape, dtype=jnp.float32)

    p = {}
    p["conv_w"] = w(ks[0], (E, E, 2))       # Conv1d weight (out, in, k)
    p["conv_b"] = w(ks[1], (E,))
    p["deconv_w"] = w(ks[2], (E, E, 2))     # ConvTranspose1d weight (in, out, k)
    p["deconv_b"] = w(ks[3], (E,))
    p["q_w"] = w(ks[4], (E // 2, E)); p["q_b"] = w(ks[5], (E // 2,))
    p["k_w"] = w(ks[6], (E // 2, E)); p["k_b"] = w(ks[7], (E // 2,))
    p["v_w"] = w(ks[8], (E // 2, E)); p["v_b"] = w(ks[9], (E // 2,))
    p["e_w"] = w(ks[10], (E // 2, E)); p["e_b"] = w(ks[11], (E // 2,))
    p["out_w"] = w(ks[12], (E, E)); p["out_b"] = w(ks[13], (E,))
    p["attn_fc_w"] = w(ks[14], (1, 3 * Hd)); p["attn_fc_b"] = w(ks[15], (1,))
    p["ln1_g"] = jnp.ones((E,), jnp.float32); p["ln1_b"] = jnp.zeros((E,), jnp.float32)
    p["fc1_w"] = w(ks[16], (F_, E)); p["fc1_b"] = w(ks[17], (F_,))
    p["fc2_w"] = w(ks[18], (E, F_)); p["fc2_b"] = w(ks[19], (E,))
    p["ln2_g"] = jnp.ones((E,), jnp.float32); p["ln2_b"] = jnp.zeros((E,), jnp.float32)
    # NOTE: GATSelfAttention.edge_proj exists in __init__ but is never used in forward.
    return p


# ---------------------------- forward pass ----------------------------

def encoder_gat_layer(x, entity, word_mask, params, num_heads):
    """x, entity: (T, B, E) f32; word_mask: (B, T) bool (True == padded key)."""
    T, B, E = x.shape
    H = num_heads
    Hd = E // H
    BH = B * H
    E2 = E // 2
    M = T * B

    x_flat = x.reshape(M, E)
    # TODO(synk): time-shift for the k=2 conv is materialized host-side (one extra
    # (M,E) copy) instead of an in-kernel roll; it is a minor cost vs. the matmuls.
    x_prev = jnp.concatenate([jnp.zeros((1, B, E), jnp.float32), x[:-1]], axis=0)
    ent_flat = entity.reshape(M, E)

    # torch weight layouts -> matmul layouts
    wc0 = params["conv_w"][:, :, 0].T          # (E, E)   multiplies x[t-1]
    wc1 = params["conv_w"][:, :, 1].T          # (E, E)   multiplies x[t]
    wq, wk, wv, we = (params["q_w"].T, params["k_w"].T,
                      params["v_w"].T, params["e_w"].T)          # (E, E/2)

    # Expand the attn_fc weight rows to block-diagonal (., H) matrices so the
    # per-head rank-1 score contraction runs on the MXU inside kernel 1.
    attn_w3 = params["attn_fc_w"].reshape(3, Hd)        # rows: [w_qe, w_ke, w_edge]
    eye_h = jnp.eye(H, dtype=jnp.float32)

    def expand(w_row):                                   # (Hd,) -> (E, H)
        return (w_row[None, :, None] * eye_h[:, None, :]).reshape(E, H)

    wsq, wsk, wse = expand(attn_w3[0]), expand(attn_w3[1]), expand(attn_w3[2])

    v, e, A, Kv, Ep = conv_qkv_score(
        x_flat, x_prev.reshape(M, E), ent_flat,
        wc0, wc1, params["conv_b"].reshape(1, E),
        wq, params["q_b"].reshape(1, E2), wk, params["k_b"].reshape(1, E2),
        wv, params["v_b"].reshape(1, E2), we, params["e_b"].reshape(1, E2),
        wsq[:E2], wsq[E2:], wsk[:E2], wsk[E2:], wse)

    # ---- GAT raw score, built with the reference's exact repeat/flat-reshape
    # sequence but on per-(token, head) scalars instead of (.., Hd) vectors.
    # TODO(synk): the torch flat reshapes scramble (i, j, bh) indices in a way
    # BlockSpec index_maps cannot express, so this O(BH*T^2) tensor is built in
    # plain JAX and streamed into the attention kernel.
    def to_bh_t(s):                                      # (M, H) -> (BH, T)
        return s.reshape(T, B, H).transpose(1, 2, 0).reshape(BH, T)

    a_bh, k_bh, e_bh = to_bh_t(A), to_bh_t(Kv), to_bh_t(Ep)
    s_qe = jnp.broadcast_to(a_bh.T[:, None, :], (T, T, BH)).reshape(BH, T, T)
    s_ke = jnp.broadcast_to(k_bh[None, :, :], (T, BH, T)).reshape(BH, T, T)
    s_ed = (e_bh.T[:, None, :] - e_bh.T[None, :, :]).reshape(BH, T, T)
    scores = (s_qe + s_ke + s_ed + params["attn_fc_b"][0]).reshape(B, H, T, T)

    mask3 = word_mask.astype(jnp.int32).reshape(B, 1, T)
    ve_flat = jnp.concatenate([v, e], axis=-1)                       # (M, E)
    ve_bhtd = ve_flat.reshape(T, B, H, Hd).transpose(1, 2, 0, 3)     # (B, H, T, Hd)

    attn4 = gat_attention(scores, mask3, ve_bhtd, H)                 # (B, H, T, Hd)
    attn_out = attn4.transpose(2, 0, 1, 3).reshape(T, B, E)

    # ---- deconv1D + out_proj + residual + LayerNorm1 (fused, dropout = identity)
    a_flat = attn_out.reshape(M, E)
    a_prev = jnp.concatenate([jnp.zeros((1, B, E), jnp.float32), attn_out[:-1]],
                             axis=0).reshape(M, E)
    h1 = deconv_out_ln(
        a_flat, a_prev, x_flat,
        params["deconv_w"][:, :, 0], params["deconv_w"][:, :, 1],
        params["deconv_b"].reshape(1, E),
        params["out_w"].T, params["out_b"].reshape(1, E),
        params["ln1_g"].reshape(1, E), params["ln1_b"].reshape(1, E))

    # ---- fc1 -> exact gelu -> fc2 + residual + LayerNorm2 (fused)
    F_ = params["fc1_w"].shape[0]
    h2 = ffn_ln(h1, params["fc1_w"].T, params["fc1_b"].reshape(1, F_),
                params["fc2_w"].T, params["fc2_b"].reshape(1, E),
                params["ln2_g"].reshape(1, E), params["ln2_b"].reshape(1, E))

    # output_attentions=False -> attn_weights is None
    return h2.reshape(T, B, E), None


# ---------------------------- demo ----------------------------

if __name__ == "__main__":
    T, B, E, H, F_ = 8, 2, 32, 4, 64
    key = jax.random.PRNGKey(0)
    kx, ke_, kp = jax.random.split(key, 3)

    x = jax.random.normal(kx, (T, B, E), dtype=jnp.float32)            # (seq, batch, embed)
    entity = jax.random.normal(ke_, (T, B, E), dtype=jnp.float32)
    word_mask = jnp.zeros((B, T), dtype=bool).at[1, T - 2:].set(True)  # True == padded key
    # encoder_padding_mask / word_subword are unused by the reference forward.

    params = init_params(kp, E, H, F_)

    out, attn = encoder_gat_layer(x, entity, word_mask, params, num_heads=H)
    out = jax.block_until_ready(out)
    assert out.shape == (T, B, E) and out.dtype == jnp.float32
    print("KERNEL_OK")
</pallas_src>

<mosaic_0001>
module attributes {stable_mosaic.version = 11 : i64} {
  func.func @_conv_qkv_score_kernel(%arg0: i32, %arg1: memref<16x32xf32, #tpu.memory_space<vmem>>, %arg2: memref<16x32xf32, #tpu.memory_space<vmem>>, %arg3: memref<16x32xf32, #tpu.memory_space<vmem>>, %arg4: memref<32x32xf32, #tpu.memory_space<vmem>>, %arg5: memref<32x32xf32, #tpu.memory_space<vmem>>, %arg6: memref<1x32xf32, #tpu.memory_space<vmem>>, %arg7: memref<32x16xf32, #tpu.memory_space<vmem>>, %arg8: memref<1x16xf32, #tpu.memory_space<vmem>>, %arg9: memref<32x16xf32, #tpu.memory_space<vmem>>, %arg10: memref<1x16xf32, #tpu.memory_space<vmem>>, %arg11: memref<32x16xf32, #tpu.memory_space<vmem>>, %arg12: memref<1x16xf32, #tpu.memory_space<vmem>>, %arg13: memref<32x16xf32, #tpu.memory_space<vmem>>, %arg14: memref<1x16xf32, #tpu.memory_space<vmem>>, %arg15: memref<16x4xf32, #tpu.memory_space<vmem>>, %arg16: memref<16x4xf32, #tpu.memory_space<vmem>>, %arg17: memref<16x4xf32, #tpu.memory_space<vmem>>, %arg18: memref<16x4xf32, #tpu.memory_space<vmem>>, %arg19: memref<32x4xf32, #tpu.memory_space<vmem>>, %arg20: memref<16x16xf32, #tpu.memory_space<vmem>>, %arg21: memref<16x16xf32, #tpu.memory_space<vmem>>, %arg22: memref<16x4xf32, #tpu.memory_space<vmem>>, %arg23: memref<16x4xf32, #tpu.memory_space<vmem>>, %arg24: memref<16x4xf32, #tpu.memory_space<vmem>>) attributes {dimension_semantics = [#tpu.dimension_semantics<parallel>], iteration_bounds = array<i64: 1>, scalar_prefetch = 0 : i64, scratch_operands = 0 : i64, tpu.core_type = #tpu.core_type<tc>, window_params = [{transform_indices = @transform_0, window_bounds = array<i64: 16, 32>}, {transform_indices = @transform_1, window_bounds = array<i64: 16, 32>}, {transform_indices = @transform_2, window_bounds = array<i64: 16, 32>}, {pipeline_mode = #tpu.pipeline_mode<synchronous>, transform_indices = @transform_3, window_bounds = array<i64: 32, 32>}, {pipeline_mode = #tpu.pipeline_mode<synchronous>, transform_indices = @transform_4, window_bounds = array<i64: 32, 32>}, {pipeline_mode = #tpu.pipeline_mode<synchronous>, transform_indices = @transform_5, window_bounds = array<i64: 1, 32>}, {pipeline_mode = #tpu.pipeline_mode<synchronous>, transform_indices = @transform_6, window_bounds = array<i64: 32, 16>}, {pipeline_mode = #tpu.pipeline_mode<synchronous>, transform_indices = @transform_7, window_bounds = array<i64: 1, 16>}, {pipeline_mode = #tpu.pipeline_mode<synchronous>, transform_indices = @transform_8, window_bounds = array<i64: 32, 16>}, {pipeline_mode = #tpu.pipeline_mode<synchronous>, transform_indices = @transform_9, window_bounds = array<i64: 1, 16>}, {pipeline_mode = #tpu.pipeline_mode<synchronous>, transform_indices = @transform_10, window_bounds = array<i64: 32, 16>}, {pipeline_mode = #tpu.pipeline_mode<synchronous>, transform_indices = @transform_11, window_bounds = array<i64: 1, 16>}, {pipeline_mode = #tpu.pipeline_mode<synchronous>, transform_indices = @transform_12, window_bounds = array<i64: 32, 16>}, {pipeline_mode = #tpu.pipeline_mode<synchronous>, transform_indices = @transform_13, window_bounds = array<i64: 1, 16>}, {pipeline_mode = #tpu.pipeline_mode<synchronous>, transform_indices = @transform_14, window_bounds = array<i64: 16, 4>}, {pipeline_mode = #tpu.pipeline_mode<synchronous>, transform_indices = @transform_15, window_bounds = array<i64: 16, 4>}, {pipeline_mode = #tpu.pipeline_mode<synchronous>, transform_indices = @transform_16, window_bounds = array<i64: 16, 4>}, {pipeline_mode = #tpu.pipeline_mode<synchronous>, transform_indices = @transform_17, window_bounds = array<i64: 16, 4>}, {pipeline_mode = #tpu.pipeline_mode<synchronous>, transform_indices = @transform_18, window_bounds = array<i64: 32, 4>}, {transform_indices = @transform_19, window_bounds = array<i64: 16, 16>}, {transform_indices = @transform_20, window_bounds = array<i64: 16, 16>}, {transform_indices = @transform_21, window_bounds = array<i64: 16, 4>}, {transform_indices = @transform_22, window_bounds = array<i64: 16, 4>}, {transform_indices = @transform_23, window_bounds = array<i64: 16, 4>}]} {
    %c0 = arith.constant 0 : index
    %c0_0 = arith.constant 0 : index
    %0 = vector.load %arg1[%c0, %c0_0] : memref<16x32xf32, #tpu.memory_space<vmem>>, vector<16x32xf32>
    %c0_1 = arith.constant 0 : index
    %c0_2 = arith.constant 0 : index
    %1 = vector.load %arg2[%c0_1, %c0_2] : memref<16x32xf32, #tpu.memory_space<vmem>>, vector<16x32xf32>
    %c0_3 = arith.constant 0 : index
    %c0_4 = arith.constant 0 : index
    %2 = vector.load %arg3[%c0_3, %c0_4] : memref<16x32xf32, #tpu.memory_space<vmem>>, vector<16x32xf32>
    %c0_5 = arith.constant 0 : index
    %c0_6 = arith.constant 0 : index
    %3 = vector.load %arg4[%c0_5, %c0_6] : memref<32x32xf32, #tpu.memory_space<vmem>>, vector<32x32xf32>
    %cst = arith.constant dense<0.000000e+00> : vector<16x32xf32>
    %4 = tpu.matmul %1, %3, %cst {dimension_numbers = #tpu.dot_dimension_numbers<[1], [0], [0], [1], [0, 0, 1, 1], [], []>} : vector<16x32xf32>, vector<32x32xf32>, vector<16x32xf32> -> vector<16x32xf32>
    %c0_7 = arith.constant 0 : index
    %c0_8 = arith.constant 0 : index
    %5 = vector.load %arg5[%c0_7, %c0_8] : memref<32x32xf32, #tpu.memory_space<vmem>>, vector<32x32xf32>
    %cst_9 = arith.constant dense<0.000000e+00> : vector<16x32xf32>
    %6 = tpu.matmul %0, %5, %cst_9 {dimension_numbers = #tpu.dot_dimension_numbers<[1], [0], [0], [1], [0, 0, 1, 1], [], []>} : vector<16x32xf32>, vector<32x32xf32>, vector<16x32xf32> -> vector<16x32xf32>
    %7 = arith.addf %4, %6 : vector<16x32xf32>
    %c0_10 = arith.constant 0 : index
    %c0_11 = arith.constant 0 : index
    %8 = vector.load %arg6[%c0_10, %c0_11] : memref<1x32xf32, #tpu.memory_space<vmem>>, vector<1x32xf32>
    %9 = vector.broadcast %8 : vector<1x32xf32> to vector<16x32xf32>
    %10 = arith.addf %7, %9 : vector<16x32xf32>
    %c0_12 = arith.constant 0 : index
    %c0_13 = arith.constant 0 : index
    %11 = vector.load %arg7[%c0_12, %c0_13] : memref<32x16xf32, #tpu.memory_space<vmem>>, vector<32x16xf32>
    %cst_14 = arith.constant dense<0.000000e+00> : vector<16x16xf32>
    %12 = tpu.matmul %10, %11, %cst_14 {dimension_numbers = #tpu.dot_dimension_numbers<[1], [0], [0], [1], [0, 0, 1, 1], [], []>} : vector<16x32xf32>, vector<32x16xf32>, vector<16x16xf32> -> vector<16x16xf32>
    %c0_15 = arith.constant 0 : index
    %c0_16 = arith.constant 0 : index
    %13 = vector.load %arg8[%c0_15, %c0_16] : memref<1x16xf32, #tpu.memory_space<vmem>>, vector<1x16xf32>
    %14 = vector.broadcast %13 : vector<1x16xf32> to vector<16x16xf32>
    %15 = arith.addf %12, %14 : vector<16x16xf32>
    %c0_17 = arith.constant 0 : index
    %c0_18 = arith.constant 0 : index
    %16 = vector.load %arg9[%c0_17, %c0_18] : memref<32x16xf32, #tpu.memory_space<vmem>>, vector<32x16xf32>
    %cst_19 = arith.constant dense<0.000000e+00> : vector<16x16xf32>
    %17 = tpu.matmul %10, %16, %cst_19 {dimension_numbers = #tpu.dot_dimension_numbers<[1], [0], [0], [1], [0, 0, 1, 1], [], []>} : vector<16x32xf32>, vector<32x16xf32>, vector<16x16xf32> -> vector<16x16xf32>
    %c0_20 = arith.constant 0 : index
    %c0_21 = arith.constant 0 : index
    %18 = vector.load %arg10[%c0_20, %c0_21] : memref<1x16xf32, #tpu.memory_space<vmem>>, vector<1x16xf32>
    %19 = vector.broadcast %18 : vector<1x16xf32> to vector<16x16xf32>
    %20 = arith.addf %17, %19 : vector<16x16xf32>
    %c0_22 = arith.constant 0 : index
    %c0_23 = arith.constant 0 : index
    %21 = vector.load %arg11[%c0_22, %c0_23] : memref<32x16xf32, #tpu.memory_space<vmem>>, vector<32x16xf32>
    %cst_24 = arith.constant dense<0.000000e+00> : vector<16x16xf32>
    %22 = tpu.matmul %10, %21, %cst_24 {dimension_numbers = #tpu.dot_dimension_numbers<[1], [0], [0], [1], [0, 0, 1, 1], [], []>} : vector<16x32xf32>, vector<32x16xf32>, vector<16x16xf32> -> vector<16x16xf32>
    %c0_25 = arith.constant 0 : index
    %c0_26 = arith.constant 0 : index
    %23 = vector.load %arg12[%c0_25, %c0_26] : memref<1x16xf32, #tpu.memory_space<vmem>>, vector<1x16xf32>
    %24 = vector.broadcast %23 : vector<1x16xf32> to vector<16x16xf32>
    %25 = arith.addf %22, %24 : vector<16x16xf32>
    %c0_27 = arith.constant 0 : index
    %c0_28 = arith.constant 0 : index
    %26 = vector.load %arg13[%c0_27, %c0_28] : memref<32x16xf32, #tpu.memory_space<vmem>>, vector<32x16xf32>
    %cst_29 = arith.constant dense<0.000000e+00> : vector<16x16xf32>
    %27 = tpu.matmul %2, %26, %cst_29 {dimension_numbers = #tpu.dot_dimension_numbers<[1], [0], [0], [1], [0, 0, 1, 1], [], []>} : vector<16x32xf32>, vector<32x16xf32>, vector<16x16xf32> -> vector<16x16xf32>
    %c0_30 = arith.constant 0 : index
    %c0_31 = arith.constant 0 : index
    %28 = vector.load %arg14[%c0_30, %c0_31] : memref<1x16xf32, #tpu.memory_space<vmem>>, vector<1x16xf32>
    %29 = vector.broadcast %28 : vector<1x16xf32> to vector<16x16xf32>
    %30 = arith.addf %27, %29 : vector<16x16xf32>
    %c0_32 = arith.constant 0 : index
    %c0_33 = arith.constant 0 : index
    %31 = vector.load %arg20[%c0_32, %c0_33] : memref<16x16xf32, #tpu.memory_space<vmem>>, vector<16x16xf32>
    tpu.vector_store %arg20[%c0_32, %c0_33], %25 {strides = array<i32>} : memref<16x16xf32, #tpu.memory_space<vmem>>, vector<16x16xf32>,
    %c0_34 = arith.constant 0 : index
    %c0_35 = arith.constant 0 : index
    %32 = vector.load %arg21[%c0_34, %c0_35] : memref<16x16xf32, #tpu.memory_space<vmem>>, vector<16x16xf32>
    tpu.vector_store %arg21[%c0_34, %c0_35], %30 {strides = array<i32>} : memref<16x16xf32, #tpu.memory_space<vmem>>, vector<16x16xf32>,
    %c0_36 = arith.constant 0 : index
    %c0_37 = arith.constant 0 : index
    %33 = vector.load %arg15[%c0_36, %c0_37] : memref<16x4xf32, #tpu.memory_space<vmem>>, vector<16x4xf32>
    %cst_38 = arith.constant dense<0.000000e+00> : vector<16x4xf32>
    %34 = tpu.matmul %15, %33, %cst_38 {dimension_numbers = #tpu.dot_dimension_numbers<[1], [0], [0], [1], [0, 0, 1, 1], [], []>} : vector<16x16xf32>, vector<16x4xf32>, vector<16x4xf32> -> vector<16x4xf32>
    %c0_39 = arith.constant 0 : index
    %c0_40 = arith.constant 0 : index
    %35 = vector.load %arg16[%c0_39, %c0_40] : memref<16x4xf32, #tpu.memory_space<vmem>>, vector<16x4xf32>
    %cst_41 = arith.constant dense<0.000000e+00> : vector<16x4xf32>
    %36 = tpu.matmul %30, %35, %cst_41 {dimension_numbers = #tpu.dot_dimension_numbers<[1], [0], [0], [1], [0, 0, 1, 1], [], []>} : vector<16x16xf32>, vector<16x4xf32>, vector<16x4xf32> -> vector<16x4xf32>
    %37 = arith.addf %34, %36 : vector<16x4xf32>
    %c0_42 = arith.constant 0 : index
    %c0_43 = arith.constant 0 : index
    %38 = vector.load %arg22[%c0_42, %c0_43] : memref<16x4xf32, #tpu.memory_space<vmem>>, vector<16x4xf32>
    tpu.vector_store %arg22[%c0_42, %c0_43], %37 {strides = array<i32>} : memref<16x4xf32, #tpu.memory_space<vmem>>, vector<16x4xf32>,
    %c0_44 = arith.constant 0 : index
    %c0_45 = arith.constant 0 : index
    %39 = vector.load %arg17[%c0_44, %c0_45] : memref<16x4xf32, #tpu.memory_space<vmem>>, vector<16x4xf32>
    %cst_46 = arith.constant dense<0.000000e+00> : vector<16x4xf32>
    %40 = tpu.matmul %20, %39, %cst_46 {dimension_numbers = #tpu.dot_dimension_numbers<[1], [0], [0], [1], [0, 0, 1, 1], [], []>} : vector<16x16xf32>, vector<16x4xf32>, vector<16x4xf32> -> vector<16x4xf32>
    %c0_47 = arith.constant 0 : index
    %c0_48 = arith.constant 0 : index
    %41 = vector.load %arg18[%c0_47, %c0_48] : memref<16x4xf32, #tpu.memory_space<vmem>>, vector<16x4xf32>
    %cst_49 = arith.constant dense<0.000000e+00> : vector<16x4xf32>
    %42 = tpu.matmul %30, %41, %cst_49 {dimension_numbers = #tpu.dot_dimension_numbers<[1], [0], [0], [1], [0, 0, 1, 1], [], []>} : vector<16x16xf32>, vector<16x4xf32>, vector<16x4xf32> -> vector<16x4xf32>
    %43 = arith.addf %40, %42 : vector<16x4xf32>
    %c0_50 = arith.constant 0 : index
    %c0_51 = arith.constant 0 : index
    %44 = vector.load %arg23[%c0_50, %c0_51] : memref<16x4xf32, #tpu.memory_space<vmem>>, vector<16x4xf32>
    tpu.vector_store %arg23[%c0_50, %c0_51], %43 {strides = array<i32>} : memref<16x4xf32, #tpu.memory_space<vmem>>, vector<16x4xf32>,
    %c0_52 = arith.constant 0 : index
    %c0_53 = arith.constant 0 : index
    %45 = vector.load %arg19[%c0_52, %c0_53] : memref<32x4xf32, #tpu.memory_space<vmem>>, vector<32x4xf32>
    %cst_54 = arith.constant dense<0.000000e+00> : vector<16x4xf32>
    %46 = tpu.matmul %2, %45, %cst_54 {dimension_numbers = #tpu.dot_dimension_numbers<[1], [0], [0], [1], [0, 0, 1, 1], [], []>} : vector<16x32xf32>, vector<32x4xf32>, vector<16x4xf32> -> vector<16x4xf32>
    %c0_55 = arith.constant 0 : index
    %c0_56 = arith.constant 0 : index
    %47 = vector.load %arg24[%c0_55, %c0_56] : memref<16x4xf32, #tpu.memory_space<vmem>>, vector<16x4xf32>
    tpu.vector_store %arg24[%c0_55, %c0_56], %46 {strides = array<i32>} : memref<16x4xf32, #tpu.memory_space<vmem>>, vector<16x4xf32>,
    return
  }
  func.func @transform_0(%arg0: i32) -> (i32, i32) {
    %c0_i32 = arith.constant 0 : i32
    %c0_i32_0 = arith.constant 0 : i32
    return %arg0, %c0_i32 : i32, i32
  }
  func.func @transform_1(%arg0: i32) -> (i32, i32) {
    %c0_i32 = arith.constant 0 : i32
    %c0_i32_0 = arith.constant 0 : i32
    return %arg0, %c0_i32 : i32, i32
  }
  func.func @transform_2(%arg0: i32) -> (i32, i32) {
    %c0_i32 = arith.constant 0 : i32
    %c0_i32_0 = arith.constant 0 : i32
    return %arg0, %c0_i32 : i32, i32
  }
  func.func @transform_3(%arg0: i32) -> (i32, i32) {
    %c0_i32 = arith.constant 0 : i32
    %c0_i32_0 = arith.constant 0 : i32
    %c0_i32_1 = arith.constant 0 : i32
    return %c0_i32, %c0_i32_0 : i32, i32
  }
  func.func @transform_4(%arg0: i32) -> (i32, i32) {
    %c0_i32 = arith.constant 0 : i32
    %c0_i32_0 = arith.constant 0 : i32
    %c0_i32_1 = arith.constant 0 : i32
    return %c0_i32, %c0_i32_0 : i32, i32
  }
  func.func @transform_5(%arg0: i32) -> (i32, i32) {
    %c0_i32 = arith.constant 0 : i32
    %c0_i32_0 = arith.constant 0 : i32
    %c0_i32_1 = arith.constant 0 : i32
    return %c0_i32, %c0_i32_0 : i32, i32
  }
  func.func @transform_6(%arg0: i32) -> (i32, i32) {
    %c0_i32 = arith.constant 0 : i32
    %c0_i32_0 = arith.constant 0 : i32
    %c0_i32_1 = arith.constant 0 : i32
    return %c0_i32, %c0_i32_0 : i32, i32
  }
  func.func @transform_7(%arg0: i32) -> (i32, i32) {
    %c0_i32 = arith.constant 0 : i32
    %c0_i32_0 = arith.constant 0 : i32
    %c0_i32_1 = arith.constant 0 : i32
    return %c0_i32, %c0_i32_0 : i32, i32
  }
  func.func @transform_8(%arg0: i32) -> (i32, i32) {
    %c0_i32 = arith.constant 0 : i32
    %c0_i32_0 = arith.constant 0 : i32
    %c0_i32_1 = arith.constant 0 : i32
    return %c0_i32, %c0_i32_0 : i32, i32
  }
  func.func @transform_9(%arg0: i32) -> (i32, i32) {
    %c0_i32 = arith.constant 0 : i32
    %c0_i32_0 = arith.constant 0 : i32
    %c0_i32_1 = arith.constant 0 : i32
    return %c0_i32, %c0_i32_0 : i32, i32
  }
  func.func @transform_10(%arg0: i32) -> (i32, i32) {
    %c0_i32 = arith.constant 0 : i32
    %c0_i32_0 = arith.constant 0 : i32
    %c0_i32_1 = arith.constant 0 : i32
    return %c0_i32, %c0_i32_0 : i32, i32
  }
  func.func @transform_11(%arg0: i32) -> (i32, i32) {
    %c0_i32 = arith.constant 0 : i32
    %c0_i32_0 = arith.constant 0 : i32
    %c0_i32_1 = arith.constant 0 : i32
    return %c0_i32, %c0_i32_0 : i32, i32
  }
  func.func @transform_12(%arg0: i32) -> (i32, i32) {
    %c0_i32 = arith.constant 0 : i32
    %c0_i32_0 = arith.constant 0 : i32
    %c0_i32_1 = arith.constant 0 : i32
    return %c0_i32, %c0_i32_0 : i32, i32
  }
  func.func @transform_13(%arg0: i32) -> (i32, i32) {
    %c0_i32 = arith.constant 0 : i32
    %c0_i32_0 = arith.constant 0 : i32
    %c0_i32_1 = arith.constant 0 : i32
    return %c0_i32, %c0_i32_0 : i32, i32
  }
  func.func @transform_14(%arg0: i32) -> (i32, i32) {
    %c0_i32 = arith.constant 0 : i32
    %c0_i32_0 = arith.constant 0 : i32
    %c0_i32_1 = arith.constant 0 : i32
    return %c0_i32, %c0_i32_0 : i32, i32
  }
  func.func @transform_15(%arg0: i32) -> (i32, i32) {
    %c0_i32 = arith.constant 0 : i32
    %c0_i32_0 = arith.constant 0 : i32
    %c0_i32_1 = arith.constant 0 : i32
    return %c0_i32, %c0_i32_0 : i32, i32
  }
  func.func @transform_16(%arg0: i32) -> (i32, i32) {
    %c0_i32 = arith.constant 0 : i32
    %c0_i32_0 = arith.constant 0 : i32
    %c0_i32_1 = arith.constant 0 : i32
    return %c0_i32, %c0_i32_0 : i32, i32
  }
  func.func @transform_17(%arg0: i32) -> (i32, i32) {
    %c0_i32 = arith.constant 0 : i32
    %c0_i32_0 = arith.constant 0 : i32
    %c0_i32_1 = arith.constant 0 : i32
    return %c0_i32, %c0_i32_0 : i32, i32
  }
  func.func @transform_18(%arg0: i32) -> (i32, i32) {
    %c0_i32 = arith.constant 0 : i32
    %c0_i32_0 = arith.constant 0 : i32
    %c0_i32_1 = arith.constant 0 : i32
    return %c0_i32, %c0_i32_0 : i32, i32
  }
  func.func @transform_19(%arg0: i32) -> (i32, i32) {
    %c0_i32 = arith.constant 0 : i32
    %c0_i32_0 = arith.constant 0 : i32
    return %arg0, %c0_i32 : i32, i32
  }
  func.func @transform_20(%arg0: i32) -> (i32, i32) {
    %c0_i32 = arith.constant 0 : i32
    %c0_i32_0 = arith.constant 0 : i32
    return %arg0, %c0_i32 : i32, i32
  }
  func.func @transform_21(%arg0: i32) -> (i32, i32) {
    %c0_i32 = arith.constant 0 : i32
    %c0_i32_0 = arith.constant 0 : i32
    return %arg0, %c0_i32 : i32, i32
  }
  func.func @transform_22(%arg0: i32) -> (i32, i32) {
    %c0_i32 = arith.constant 0 : i32
    %c0_i32_0 = arith.constant 0 : i32
    return %arg0, %c0_i32 : i32, i32
  }
  func.func @transform_23(%arg0: i32) -> (i32, i32) {
    %c0_i32 = arith.constant 0 : i32
    %c0_i32_0 = arith.constant 0 : i32
    return %arg0, %c0_i32 : i32, i32
  }
}

</mosaic_0001>

<llo_original>
// kernel: tpu_custom_call.1
$region0: #{tpu_custom_call.1}
  #allocation0 [shape = 'u32[]', space=smem, size = 0x4, offset = 0x4, fixed_abs, tag = 'smem constant byte address 0x4 - core index']
  #allocation1 [shape = 'u32[144,128]{1,0:T(1,128)}', space=vmem, size = 0x12000, scoped, tag = 'internal scratch']
  %s0 = inlined_call_operand.vmem [shape: f32[16,32], index: 0, kind: input, shape index: {}]
  %s1 = inlined_call_operand.vmem [shape: f32[16,32], index: 1, kind: input, shape index: {}]
  %s2 = inlined_call_operand.vmem [shape: f32[16,32], index: 2, kind: input, shape index: {}]
  %s3 = inlined_call_operand.vmem [shape: f32[32,32], index: 3, kind: input, shape index: {}]
  %s4 = inlined_call_operand.vmem [shape: f32[32,32], index: 4, kind: input, shape index: {}]
  %s5 = inlined_call_operand.vmem [shape: f32[1,32], index: 5, kind: input, shape index: {}]
  %s6 = inlined_call_operand.vmem [shape: f32[32,16], index: 6, kind: input, shape index: {}]
  %s7 = inlined_call_operand.vmem [shape: f32[1,16], index: 7, kind: input, shape index: {}]
  %s8 = inlined_call_operand.vmem [shape: f32[32,16], index: 8, kind: input, shape index: {}]
  %s9 = inlined_call_operand.vmem [shape: f32[1,16], index: 9, kind: input, shape index: {}]
  %s10 = inlined_call_operand.vmem [shape: f32[32,16], index: 10, kind: input, shape index: {}]
  %s11 = inlined_call_operand.vmem [shape: f32[1,16], index: 11, kind: input, shape index: {}]
  %s12 = inlined_call_operand.vmem [shape: f32[32,16], index: 12, kind: input, shape index: {}]
  %s13 = inlined_call_operand.vmem [shape: f32[1,16], index: 13, kind: input, shape index: {}]
  %s14 = inlined_call_operand.vmem [shape: f32[16,4], index: 14, kind: input, shape index: {}]
  %s15 = inlined_call_operand.vmem [shape: f32[16,4], index: 15, kind: input, shape index: {}]
  %s16 = inlined_call_operand.vmem [shape: f32[16,4], index: 16, kind: input, shape index: {}]
  %s17 = inlined_call_operand.vmem [shape: f32[16,4], index: 17, kind: input, shape index: {}]
  %s18 = inlined_call_operand.vmem [shape: f32[32,4], index: 18, kind: input, shape index: {}]
  %s19 = inlined_call_operand.hbm [shape: f32[16,16], index: 19, kind: output, shape index: {0}]
  %s20 = inlined_call_operand.hbm [shape: f32[16,16], index: 20, kind: output, shape index: {1}]
  %s21 = inlined_call_operand.vmem [shape: f32[16,4], index: 21, kind: output, shape index: {2}]
  %s22 = inlined_call_operand.vmem [shape: f32[16,4], index: 22, kind: output, shape index: {3}]
  %s23 = inlined_call_operand.vmem [shape: f32[16,4], index: 23, kind: output, shape index: {4}]
  %24 = xla_tuple %s19, %s20, %s21, %s22, %s23
  %s25 = sld [smem:[#allocation0]]
  $region118: #{tpu_custom_call.1} parent=0
    _
  %s27 = ssub.s32 1, %s25
  %s28 = scalar_select 0, %s27, %s25
  $region1: #{tpu_custom_call.1} parent=0
    #allocation2 [shape = 'u8[8192]{0}', space=vmem, size = 0x2000, scoped, tag = 'output window, operand 0, single buffered']
    #allocation3 [shape = 's32[1]{0}', space=sflag, size = 0x4, scoped, tag = 'scoped memory for tpu_custom_call.1']
    #allocation4 [shape = 'u8[8192]{0}', space=vmem, size = 0x2000, scoped, tag = 'output window, operand 1, single buffered']
    #allocation5 [shape = 's32[1]{0}', space=sflag, size = 0x4, scoped, tag = 'scoped memory for tpu_custom_call.1']
    %29 = vsyncpa [#allocation3], 0
    %30 = vsyncpa [#allocation5], 0
    // Predicated region
    $region2: #{tpu_custom_call.1} parent=1 // pred_check
      _
    $region3: #{tpu_custom_call.1} parent=1 // pred_check_branch
      %32 = sbr.rel (0) target = $region5
    $region4: #{tpu_custom_call.1} parent=1 // pred_region
      _
    $region5: #{tpu_custom_call.1} parent=1 // pred_fallthru
      _
    // Predicated region
    $region6: #{tpu_custom_call.1} parent=1 // pred_check
      _
    $region7: #{tpu_custom_call.1} parent=1 // pred_check_branch
      %34 = sbr.rel (0) target = $region9
    $region8: #{tpu_custom_call.1} parent=1 // pred_region
      _
    $region9: #{tpu_custom_call.1} parent=1 // pred_fallthru
      _
    // Predicated region
    $region10: #{tpu_custom_call.1} parent=1 // pred_check
      _
    $region11: #{tpu_custom_call.1} parent=1 // pred_check_branch
      %36 = sbr.rel (0) target = $region13
    $region12: #{tpu_custom_call.1} parent=1 // pred_region
      _
    $region13: #{tpu_custom_call.1} parent=1 // pred_fallthru
      _
    // Predicated region
    $region14: #{tpu_custom_call.1} parent=1 // pred_check
      _
    $region15: #{tpu_custom_call.1} parent=1 // pred_check_branch
      %38 = sbr.rel (0) target = $region17
    $region16: #{tpu_custom_call.1} parent=1 // pred_region
      _
    $region17: #{tpu_custom_call.1} parent=1 // pred_fallthru
      _
    // Predicated region
    $region18: #{tpu_custom_call.1} parent=1 // pred_check
      _
    $region19: #{tpu_custom_call.1} parent=1 // pred_check_branch
      %40 = sbr.rel (0) target = $region21
    $region20: #{tpu_custom_call.1} parent=1 // pred_region
      _
    $region21: #{tpu_custom_call.1} parent=1 // pred_fallthru
      _
    // Predicated region
    $region22: #{tpu_custom_call.1} parent=1 // pred_check
      _
    $region23: #{tpu_custom_call.1} parent=1 // pred_check_branch
      %42 = sbr.rel (0) target = $region25
    $region24: #{tpu_custom_call.1} parent=1 // pred_region
      _
    $region25: #{tpu_custom_call.1} parent=1 // pred_fallthru
      _
    // Predicated region
    $region26: #{tpu_custom_call.1} parent=1 // pred_check
      _
    $region27: #{tpu_custom_call.1} parent=1 // pred_check_branch
      %44 = sbr.rel (0) target = $region29
    $region28: #{tpu_custom_call.1} parent=1 // pred_region
      _
    $region29: #{tpu_custom_call.1} parent=1 // pred_fallthru
      _
    // Predicated region
    $region30: #{tpu_custom_call.1} parent=1 // pred_check
      _
    $region31: #{tpu_custom_call.1} parent=1 // pred_check_branch
      %46 = sbr.rel (0) target = $region33
    $region32: #{tpu_custom_call.1} parent=1 // pred_region
      _
    $region33: #{tpu_custom_call.1} parent=1 // pred_fallthru
      _
    // Predicated region
    $region34: #{tpu_custom_call.1} parent=1 // pred_check
      _
    $region35: #{tpu_custom_call.1} parent=1 // pred_check_branch
      %48 = sbr.rel (0) target = $region37
    $region36: #{tpu_custom_call.1} parent=1 // pred_region
      _
    $region37: #{tpu_custom_call.1} parent=1 // pred_fallthru
      _
    // Predicated region
    $region38: #{tpu_custom_call.1} parent=1 // pred_check
      _
    $region39: #{tpu_custom_call.1} parent=1 // pred_check_branch
      %50 = sbr.rel (0) target = $region41
    $region40: #{tpu_custom_call.1} parent=1 // pred_region
      _
    $region41: #{tpu_custom_call.1} parent=1 // pred_fallthru
      _
    // Predicated region
    $region42: #{tpu_custom_call.1} parent=1 // pred_check
      _
    $region43: #{tpu_custom_call.1} parent=1 // pred_check_branch
      %52 = sbr.rel (0) target = $region45
    $region44: #{tpu_custom_call.1} parent=1 // pred_region
      _
    $region45: #{tpu_custom_call.1} parent=1 // pred_fallthru
      _
    // Predicated region
    $region46: #{tpu_custom_call.1} parent=1 // pred_check
      _
    $region47: #{tpu_custom_call.1} parent=1 // pred_check_branch
      %54 = sbr.rel (0) target = $region49
    $region48: #{tpu_custom_call.1} parent=1 // pred_region
      _
    $region49: #{tpu_custom_call.1} parent=1 // pred_fallthru
      _
    // Predicated region
    $region50: #{tpu_custom_call.1} parent=1 // pred_check
      _
    $region51: #{tpu_custom_call.1} parent=1 // pred_check_branch
      %56 = sbr.rel (0) target = $region53
    $region52: #{tpu_custom_call.1} parent=1 // pred_region
      _
    $region53: #{tpu_custom_call.1} parent=1 // pred_fallthru
      _
    // Predicated region
    $region54: #{tpu_custom_call.1} parent=1 // pred_check
      _
    $region55: #{tpu_custom_call.1} parent=1 // pred_check_branch
      %58 = sbr.rel (0) target = $region57
    $region56: #{tpu_custom_call.1} parent=1 // pred_region
      _
    $region57: #{tpu_custom_call.1} parent=1 // pred_fallthru
      _
    // Predicated region
    $region58: #{tpu_custom_call.1} parent=1 // pred_check
      _
    $region59: #{tpu_custom_call.1} parent=1 // pred_check_branch
      %60 = sbr.rel (0) target = $region61
    $region60: #{tpu_custom_call.1} parent=1 // pred_region
      _
    $region61: #{tpu_custom_call.1} parent=1 // pred_fallthru
      _
    // Predicated region
    $region62: #{tpu_custom_call.1} parent=1 // pred_check
      _
    $region63: #{tpu_custom_call.1} parent=1 // pred_check_branch
      %62 = sbr.rel (0) target = $region65
    $region64: #{tpu_custom_call.1} parent=1 // pred_region
      _
    $region65: #{tpu_custom_call.1} parent=1 // pred_fallthru
      _
    // Predicated region
    $region66: #{tpu_custom_call.1} parent=1 // pred_check
      _
    $region67: #{tpu_custom_call.1} parent=1 // pred_check_branch
      %64 = sbr.rel (0) target = $region69
    $region68: #{tpu_custom_call.1} parent=1 // pred_region
      _
    $region69: #{tpu_custom_call.1} parent=1 // pred_fallthru
      _
    // Predicated region
    $region70: #{tpu_custom_call.1} parent=1 // pred_check
      _
    $region71: #{tpu_custom_call.1} parent=1 // pred_check_branch
      %66 = sbr.rel (0) target = $region73
    $region72: #{tpu_custom_call.1} parent=1 // pred_region
      _
    $region73: #{tpu_custom_call.1} parent=1 // pred_fallthru
      _
    // Predicated region
    $region74: #{tpu_custom_call.1} parent=1 // pred_check
      _
    $region75: #{tpu_custom_call.1} parent=1 // pred_check_branch
      %68 = sbr.rel (0) target = $region77
    $region76: #{tpu_custom_call.1} parent=1 // pred_region
      _
    $region77: #{tpu_custom_call.1} parent=1 // pred_fallthru
      _
    %v69 = vld [vmem:[%s0] sm:$0xff]
    %v70 = vld [vmem:[%s0 + $0x8] sm:$0xff]
    %v71 = vld [vmem:[%s1] sm:$0xff]
    %v72 = vld [vmem:[%s1 + $0x8] sm:$0xff]
    %v73 = vld [vmem:[%s2] sm:$0xff]
    %v74 = vld [vmem:[%s2 + $0x8] sm:$0xff]
    %v75 = vld [vmem:[%s3] sm:$0xff]
    %v76 = vld [vmem:[%s3 + $0x8] sm:$0xff]
    %v77 = vld [vmem:[%s3 + $0x10] sm:$0xff]
    %v78 = vld [vmem:[%s3 + $0x18] sm:$0xff]
    %v79 = vld [vmem:[%s4] sm:$0xff]
    %v80 = vld [vmem:[%s4 + $0x8] sm:$0xff]
    %v81 = vld [vmem:[%s4 + $0x10] sm:$0xff]
    %v82 = vld [vmem:[%s4 + $0x18] sm:$0xff]
    %vm83 = vcmask 261120
    %v85 = vsel %vm83, %v69, 0
    %v88 = vsel %vm83, %v70, 0
    %90 = vmatprep.subr.mxu0 0.0
    %91 = vmatpush1.msra.mxu0 %v79
    %92 = vmatprep.subr.mxu0 0.0
    %93 = vmatpush1.msra.mxu0 %v80
    %94 = vmatprep.subr.mxu0 0.0
    %95 = vmatpush1.msra.mxu0 %v81
    %96 = vmatprep.subr.mxu0 0.0
    %97 = vmatpush1.msra.mxu0 %v82
    %98 = vmatprep.subr.mxu0 0.0
    %99 = vmatpush1.msra.mxu0 0.0
    %100 = vmatprep.subr.mxu0 0.0
    %101 = vmatpush1.msra.mxu0 0.0
    %102 = vmatprep.subr.mxu0 0.0
    %103 = vmatpush1.msra.mxu0 0.0
    %104 = vmatprep.subr.mxu0 0.0
    %105 = vmatpush1.msra.mxu0 0.0
    %106 = vmatprep.subr.mxu0 0.0
    %107 = vmatpush1.msra.mxu0 0.0
    %108 = vmatprep.subr.mxu0 0.0
    %109 = vmatpush1.msra.mxu0 0.0
    %110 = vmatprep.subr.mxu0 0.0
    %111 = vmatpush1.msra.mxu0 0.0
    %112 = vmatprep.subr.mxu0 0.0
    %113 = vmatpush1.msra.mxu0 0.0
    %114 = vmatprep.subr.mxu0 0.0
    %115 = vmatpush1.msra.mxu0 0.0
    %116 = vmatprep.subr.mxu0 0.0
    %117 = vmatpush1.msra.mxu0 0.0
    %118 = vmatprep.subr.mxu0 0.0
    %119 = vmatpush1.msra.mxu0 0.0
    %120 = vmatprep.subr.mxu0 0.0
    %121 = vmatpush1.msra.mxu0 0.0
    %122 = vmatprep.subr.mxu0 0.0
    %123 = vmatpush1.msra.mxu0 0.0
    %124 = vmatprep.subr.mxu0 0.0
    %125 = vmatpush1.msra.mxu0 0.0
    %126 = vmatprep.subr.mxu0 0.0
    %127 = vmatpush1.msra.mxu0 0.0
    %128 = vmatprep.subr.mxu0 0.0
    %129 = vmatpush1.msra.mxu0 0.0
    %130 = vmatprep.subr.mxu0 0.0
    %131 = vmatpush1.msra.mxu0 0.0
    %132 = vmatprep.subr.mxu0 0.0
    %133 = vmatpush1.msra.mxu0 0.0
    %134 = vmatprep.subr.mxu0 0.0
    %135 = vmatpush1.msra.mxu0 0.0
    %136 = vmatprep.subr.mxu0 0.0
    %137 = vmatpush1.msra.mxu0 0.0
    %138 = vmatprep.subr.mxu0 0.0
    %139 = vmatpush1.msra.mxu0 0.0
    %140 = vmatprep.subr.mxu0 0.0
    %141 = vmatpush1.msra.mxu0 0.0
    %142 = vmatprep.subr.mxu0 0.0
    %143 = vmatpush1.msra.mxu0 0.0
    %144 = vmatprep.subr.mxu0 0.0
    %145 = vmatpush1.msra.mxu0 0.0
    %146 = vmatprep.subr.mxu0 0.0
    %147 = vmatpush1.msra.mxu0 0.0
    %148 = vmatprep.subr.mxu0 0.0
    %149 = vmatpush1.msra.mxu0 0.0
    %150 = vmatprep.subr.mxu0 0.0
    %151 = vmatpush1.msra.mxu0 0.0
    %152 = vmatprep.subr.mxu0 0.0
    %153 = vmatpush1.msra.mxu0 0.0
    %154 = vmatprep.mubr.f32.mxu0 0.0
    %155 = vmatmul.mubr.f32.gmra.mrb[0].mxu0 %v85
    %v156 = vpop.f32.mrb[0].mxu0
    %v157 = vadd.f32 0.0, %v156
    %v158 = vpop.f32.mrb[0].mxu0
    %159 = vmatprep.mubr.f32.mxu0 0.0
    %160 = vmatmul.mubr.f32.gmra.mrb[0].mxu0 %v88
    %v161 = vpop.f32.mrb[0].mxu0
    %v162 = vadd.f32 0.0, %v161
    %v163 = vpop.f32.mrb[0].mxu0
    %164 = vdwg.mxu0
    %v166 = vsel %vm83, %v71, 0
    %v169 = vsel %vm83, %v72, 0
    %171 = vmatprep.subr.mxu0 0.0
    %172 = vmatpush1.msra.mxu0 %v75
    %173 = vmatprep.subr.mxu0 0.0
    %174 = vmatpush1.msra.mxu0 %v76
    %175 = vmatprep.subr.mxu0 0.0
    %176 = vmatpush1.msra.mxu0 %v77
    %177 = vmatprep.subr.mxu0 0.0
    %178 = vmatpush1.msra.mxu0 %v78
    %179 = vmatprep.subr.mxu0 0.0
    %180 = vmatpush1.msra.mxu0 0.0
    %181 = vmatprep.subr.mxu0 0.0
    %182 = vmatpush1.msra.mxu0 0.0
    %183 = vmatprep.subr.mxu0 0.0
    %184 = vmatpush1.msra.mxu0 0.0
    %185 = vmatprep.subr.mxu0 0.0
    %186 = vmatpush1.msra.mxu0 0.0
    %187 = vmatprep.subr.mxu0 0.0
    %188 = vmatpush1.msra.mxu0 0.0
    %189 = vmatprep.subr.mxu0 0.0
    %190 = vmatpush1.msra.mxu0 0.0
    %191 = vmatprep.subr.mxu0 0.0
    %192 = vmatpush1.msra.mxu0 0.0
    %193 = vmatprep.subr.mxu0 0.0
    %194 = vmatpush1.msra.mxu0 0.0
    %195 = vmatprep.subr.mxu0 0.0
    %196 = vmatpush1.msra.mxu0 0.0
    %197 = vmatprep.subr.mxu0 0.0
    %198 = vmatpush1.msra.mxu0 0.0
    %199 = vmatprep.subr.mxu0 0.0
    %200 = vmatpush1.msra.mxu0 0.0
    %201 = vmatprep.subr.mxu0 0.0
    %202 = vmatpush1.msra.mxu0 0.0
    %203 = vmatprep.subr.mxu0 0.0
    %204 = vmatpush1.msra.mxu0 0.0
    %205 = vmatprep.subr.mxu0 0.0
    %206 = vmatpush1.msra.mxu0 0.0
    %207 = vmatprep.subr.mxu0 0.0
    %208 = vmatpush1.msra.mxu0 0.0
    %209 = vmatprep.subr.mxu0 0.0
    %210 = vmatpush1.msra.mxu0 0.0
    %211 = vmatprep.subr.mxu0 0.0
    %212 = vmatpush1.msra.mxu0 0.0
    %213 = vmatprep.subr.mxu0 0.0
    %214 = vmatpush1.msra.mxu0 0.0
    %215 = vmatprep.subr.mxu0 0.0
    %216 = vmatpush1.msra.mxu0 0.0
    %217 = vmatprep.subr.mxu0 0.0
    %218 = vmatpush1.msra.mxu0 0.0
    %219 = vmatprep.subr.mxu0 0.0
    %220 = vmatpush1.msra.mxu0 0.0
    %221 = vmatprep.subr.mxu0 0.0
    %222 = vmatpush1.msra.mxu0 0.0
    %223 = vmatprep.subr.mxu0 0.0
    %224 = vmatpush1.msra.mxu0 0.0
    %225 = vmatprep.subr.mxu0 0.0
    %226 = vmatpush1.msra.mxu0 0.0
    %227 = vmatprep.subr.mxu0 0.0
    %228 = vmatpush1.msra.mxu0 0.0
    %229 = vmatprep.subr.mxu0 0.0
    %230 = vmatpush1.msra.mxu0 0.0
    %231 = vmatprep.subr.mxu0 0.0
    %232 = vmatpush1.msra.mxu0 0.0
    %233 = vmatprep.subr.mxu0 0.0
    %234 = vmatpush1.msra.mxu0 0.0
    %235 = vmatprep.mubr.f32.mxu0 0.0
    %236 = vmatmul.mubr.f32.gmra.mrb[0].mxu0 %v166
    %v237 = vpop.f32.mrb[0].mxu0
    %v238 = vadd.f32 %v157, %v237
    %v239 = vpop.f32.mrb[0].mxu0
    %240 = vmatprep.mubr.f32.mxu0 0.0
    %241 = vmatmul.mubr.f32.gmra.mrb[0].mxu0 %v169
    %v242 = vpop.f32.mrb[0].mxu0
    %v243 = vadd.f32 %v162, %v242
    %v244 = vpop.f32.mrb[0].mxu0
    %245 = vdwg.mxu0
    %v246 = vld [vmem:[%s5] sm:$0x1]
    %v248 = vlaneseq
    %v249 = vshrl.u32 %v248, 7
    %v250 = vsub.s32 0, %v249
    %v251 = vrot.slane %v246, %v250
    %v253 = vadd.f32 %v238, %v251
    %v254 = vadd.f32 %v243, %v251
    %v255 = vld [vmem:[%s6] sm:$0xff]
    %v256 = vld [vmem:[%s6 + $0x8] sm:$0xff]
    %v257 = vld [vmem:[%s6 + $0x10] sm:$0xff]
    %v258 = vld [vmem:[%s6 + $0x18] sm:$0xff]
    %v259 = vld [vmem:[%s7] sm:$0x1]
    %v261 = vlaneseq
    %v262 = vshrl.u32 %v261, 7
    %v263 = vsub.s32 0, %v262
    %v264 = vrot.slane %v259, %v263
    %v267 = vsel %vm83, %v253, 0
    %v270 = vsel %vm83, %v254, 0
    %272 = vmatprep.subr.mxu0 0.0
    %273 = vmatpush1.msra.mxu0 %v255
    %274 = vmatprep.subr.mxu0 0.0
    %275 = vmatpush1.msra.mxu0 %v256
    %276 = vmatprep.subr.mxu0 0.0
    %277 = vmatpush1.msra.mxu0 %v257
    %278 = vmatprep.subr.mxu0 0.0
    %279 = vmatpush1.msra.mxu0 %v258
    %280 = vmatprep.subr.mxu0 0.0
    %281 = vmatpush1.msra.mxu0 0.0
    %282 = vmatprep.subr.mxu0 0.0
    %283 = vmatpush1.msra.mxu0 0.0
    %284 = vmatprep.subr.mxu0 0.0
    %285 = vmatpush1.msra.mxu0 0.0
    %286 = vmatprep.subr.mxu0 0.0
    %287 = vmatpush1.msra.mxu0 0.0
    %288 = vmatprep.subr.mxu0 0.0
    %289 = vmatpush1.msra.mxu0 0.0
    %290 = vmatprep.subr.mxu0 0.0
    %291 = vmatpush1.msra.mxu0 0.0
    %292 = vmatprep.subr.mxu0 0.0
    %293 = vmatpush1.msra.mxu0 0.0
    %294 = vmatprep.subr.mxu0 0.0
    %295 = vmatpush1.msra.mxu0 0.0
    %296 = vmatprep.subr.mxu0 0.0
    %297 = vmatpush1.msra.mxu0 0.0
    %298 = vmatprep.subr.mxu0 0.0
    %299 = vmatpush1.msra.mxu0 0.0
    %300 = vmatprep.subr.mxu0 0.0
    %301 = vmatpush1.msra.mxu0 0.0
    %302 = vmatprep.subr.mxu0 0.0
    %303 = vmatpush1.msra.mxu0 0.0
    %304 = vmatprep.subr.mxu0 0.0
    %305 = vmatpush1.msra.mxu0 0.0
    %306 = vmatprep.subr.mxu0 0.0
    %307 = vmatpush1.msra.mxu0 0.0
    %308 = vmatprep.subr.mxu0 0.0
    %309 = vmatpush1.msra.mxu0 0.0
    %310 = vmatprep.subr.mxu0 0.0
    %311 = vmatpush1.msra.mxu0 0.0
    %312 = vmatprep.subr.mxu0 0.0
    %313 = vmatpush1.msra.mxu0 0.0
    %314 = vmatprep.subr.mxu0 0.0
    %315 = vmatpush1.msra.mxu0 0.0
    %316 = vmatprep.subr.mxu0 0.0
    %317 = vmatpush1.msra.mxu0 0.0
    %318 = vmatprep.subr.mxu0 0.0
    %319 = vmatpush1.msra.mxu0 0.0
    %320 = vmatprep.subr.mxu0 0.0
    %321 = vmatpush1.msra.mxu0 0.0
    %322 = vmatprep.subr.mxu0 0.0
    %323 = vmatpush1.msra.mxu0 0.0
    %324 = vmatprep.subr.mxu0 0.0
    %325 = vmatpush1.msra.mxu0 0.0
    %326 = vmatprep.subr.mxu0 0.0
    %327 = vmatpush1.msra.mxu0 0.0
    %328 = vmatprep.subr.mxu0 0.0
    %329 = vmatpush1.msra.mxu0 0.0
    %330 = vmatprep.subr.mxu0 0.0
    %331 = vmatpush1.msra.mxu0 0.0
    %332 = vmatprep.subr.mxu0 0.0
    %333 = vmatpush1.msra.mxu0 0.0
    %334 = vmatprep.subr.mxu0 0.0
    %335 = vmatpush1.msra.mxu0 0.0
    %336 = vmatprep.mubr.f32.mxu0 0.0
    %337 = vmatmul.mubr.f32.gmra.mrb[0].mxu0 %v267
    %v338 = vpop.f32.mrb[0].mxu0
    %v339 = vadd.f32 %v264, %v338
    %v340 = vpop.f32.mrb[0].mxu0
    %341 = vmatprep.mubr.f32.mxu0 0.0
    %342 = vmatmul.mubr.f32.gmra.mrb[0].mxu0 %v270
    %v343 = vpop.f32.mrb[0].mxu0
    %v344 = vadd.f32 %v264, %v343
    %v345 = vpop.f32.mrb[0].mxu0
    %346 = vdwg.mxu0
    %v347 = vld [vmem:[%s8] sm:$0xff]
    %v348 = vld [vmem:[%s8 + $0x8] sm:$0xff]
    %v349 = vld [vmem:[%s8 + $0x10] sm:$0xff]
    %v350 = vld [vmem:[%s8 + $0x18] sm:$0xff]
    %v351 = vld [vmem:[%s9] sm:$0x1]
    %v353 = vlaneseq
    %v354 = vshrl.u32 %v353, 7
    %v355 = vsub.s32 0, %v354
    %v356 = vrot.slane %v351, %v355
    %358 = vmatprep.subr.mxu0 0.0
    %359 = vmatpush1.msra.mxu0 %v347
    %360 = vmatprep.subr.mxu0 0.0
    %361 = vmatpush1.msra.mxu0 %v348
    %362 = vmatprep.subr.mxu0 0.0
    %363 = vmatpush1.msra.mxu0 %v349
    %364 = vmatprep.subr.mxu0 0.0
    %365 = vmatpush1.msra.mxu0 %v350
    %366 = vmatprep.subr.mxu0 0.0
    %367 = vmatpush1.msra.mxu0 0.0
    %368 = vmatprep.subr.mxu0 0.0
    %369 = vmatpush1.msra.mxu0 0.0
    %370 = vmatprep.subr.mxu0 0.0
    %371 = vmatpush1.msra.mxu0 0.0
    %372 = vmatprep.subr.mxu0 0.0
    %373 = vmatpush1.msra.mxu0 0.0
    %374 = vmatprep.subr.mxu0 0.0
    %375 = vmatpush1.msra.mxu0 0.0
    %376 = vmatprep.subr.mxu0 0.0
    %377 = vmatpush1.msra.mxu0 0.0
    %378 = vmatprep.subr.mxu0 0.0
    %379 = vmatpush1.msra.mxu0 0.0
    %380 = vmatprep.subr.mxu0 0.0
    %381 = vmatpush1.msra.mxu0 0.0
    %382 = vmatprep.subr.mxu0 0.0
    %383 = vmatpush1.msra.mxu0 0.0
    %384 = vmatprep.subr.mxu0 0.0
    %385 = vmatpush1.msra.mxu0 0.0
    %386 = vmatprep.subr.mxu0 0.0
    %387 = vmatpush1.msra.mxu0 0.0
    %388 = vmatprep.subr.mxu0 0.0
    %389 = vmatpush1.msra.mxu0 0.0
    %390 = vmatprep.subr.mxu0 0.0
    %391 = vmatpush1.msra.mxu0 0.0
    %392 = vmatprep.subr.mxu0 0.0
    %393 = vmatpush1.msra.mxu0 0.0
    %394 = vmatprep.subr.mxu0 0.0
    %395 = vmatpush1.msra.mxu0 0.0
    %396 = vmatprep.subr.mxu0 0.0
    %397 = vmatpush1.msra.mxu0 0.0
    %398 = vmatprep.subr.mxu0 0.0
    %399 = vmatpush1.msra.mxu0 0.0
    %400 = vmatprep.subr.mxu0 0.0
    %401 = vmatpush1.msra.mxu0 0.0
    %402 = vmatprep.subr.mxu0 0.0
    %403 = vmatpush1.msra.mxu0 0.0
    %404 = vmatprep.subr.mxu0 0.0
    %405 = vmatpush1.msra.mxu0 0.0
    %406 = vmatprep.subr.mxu0 0.0
    %407 = vmatpush1.msra.mxu0 0.0
    %408 = vmatprep.subr.mxu0 0.0
    %409 = vmatpush1.msra.mxu0 0.0
    %410 = vmatprep.subr.mxu0 0.0
    %411 = vmatpush1.msra.mxu0 0.0
    %412 = vmatprep.subr.mxu0 0.0
    %413 = vmatpush1.msra.mxu0 0.0
    %414 = vmatprep.subr.mxu0 0.0
    %415 = vmatpush1.msra.mxu0 0.0
    %416 = vmatprep.subr.mxu0 0.0
    %417 = vmatpush1.msra.mxu0 0.0
    %418 = vmatprep.subr.mxu0 0.0
    %419 = vmatpush1.msra.mxu0 0.0
    %420 = vmatprep.subr.mxu0 0.0
    %421 = vmatpush1.msra.mxu0 0.0
    %422 = vmatprep.mubr.f32.mxu0 0.0
    %423 = vmatmul.mubr.f32.gmra.mrb[0].mxu0 %v267
    %v424 = vpop.f32.mrb[0].mxu0
    %v425 = vadd.f32 %v356, %v424
    %v426 = vpop.f32.mrb[0].mxu0
    %427 = vmatprep.mubr.f32.mxu0 0.0
    %428 = vmatmul.mubr.f32.gmra.mrb[0].mxu0 %v270
    %v429 = vpop.f32.mrb[0].mxu0
    %v430 = vadd.f32 %v356, %v429
    %v431 = vpop.f32.mrb[0].mxu0
    %432 = vdwg.mxu0
    %v433 = vld [vmem:[%s10] sm:$0xff]
    %v434 = vld [vmem:[%s10 + $0x8] sm:$0xff]
    %v435 = vld [vmem:[%s10 + $0x10] sm:$0xff]
    %v436 = vld [vmem:[%s10 + $0x18] sm:$0xff]
    %v437 = vld [vmem:[%s11] sm:$0x1]
    %v439 = vlaneseq
    %v440 = vshrl.u32 %v439, 7
    %v441 = vsub.s32 0, %v440
    %v442 = vrot.slane %v437, %v441
    %444 = vmatprep.subr.mxu0 0.0
    %445 = vmatpush1.msra.mxu0 %v433
    %446 = vmatprep.subr.mxu0 0.0
    %447 = vmatpush1.msra.mxu0 %v434
    %448 = vmatprep.subr.mxu0 0.0
    %449 = vmatpush1.msra.mxu0 %v435
    %450 = vmatprep.subr.mxu0 0.0
    %451 = vmatpush1.msra.mxu0 %v436
    %452 = vmatprep.subr.mxu0 0.0
    %453 = vmatpush1.msra.mxu0 0.0
    %454 = vmatprep.subr.mxu0 0.0
    %455 = vmatpush1.msra.mxu0 0.0
    %456 = vmatprep.subr.mxu0 0.0
    %457 = vmatpush1.msra.mxu0 0.0
    %458 = vmatprep.subr.mxu0 0.0
    %459 = vmatpush1.msra.mxu0 0.0
    %460 = vmatprep.subr.mxu0 0.0
    %461 = vmatpush1.msra.mxu0 0.0
    %462 = vmatprep.subr.mxu0 0.0
    %463 = vmatpush1.msra.mxu0 0.0
    %464 = vmatprep.subr.mxu0 0.0
    %465 = vmatpush1.msra.mxu0 0.0
    %466 = vmatprep.subr.mxu0 0.0
    %467 = vmatpush1.msra.mxu0 0.0
    %468 = vmatprep.subr.mxu0 0.0
    %469 = vmatpush1.msra.mxu0 0.0
    %470 = vmatprep.subr.mxu0 0.0
    %471 = vmatpush1.msra.mxu0 0.0
    %472 = vmatprep.subr.mxu0 0.0
    %473 = vmatpush1.msra.mxu0 0.0
    %474 = vmatprep.subr.mxu0 0.0
    %475 = vmatpush1.msra.mxu0 0.0
    %476 = vmatprep.subr.mxu0 0.0
    %477 = vmatpush1.msra.mxu0 0.0
    %478 = vmatprep.subr.mxu0 0.0
    %479 = vmatpush1.msra.mxu0 0.0
    %480 = vmatprep.subr.mxu0 0.0
    %481 = vmatpush1.msra.mxu0 0.0
    %482 = vmatprep.subr.mxu0 0.0
    %483 = vmatpush1.msra.mxu0 0.0
    %484 = vmatprep.subr.mxu0 0.0
    %485 = vmatpush1.msra.mxu0 0.0
    %486 = vmatprep.subr.mxu0 0.0
    %487 = vmatpush1.msra.mxu0 0.0
    %488 = vmatprep.subr.mxu0 0.0
    %489 = vmatpush1.msra.mxu0 0.0
    %490 = vmatprep.subr.mxu0 0.0
    %491 = vmatpush1.msra.mxu0 0.0
    %492 = vmatprep.subr.mxu0 0.0
    %493 = vmatpush1.msra.mxu0 0.0
    %494 = vmatprep.subr.mxu0 0.0
    %495 = vmatpush1.msra.mxu0 0.0
    %496 = vmatprep.subr.mxu0 0.0
    %497 = vmatpush1.msra.mxu0 0.0
    %498 = vmatprep.subr.mxu0 0.0
    %499 = vmatpush1.msra.mxu0 0.0
    %500 = vmatprep.subr.mxu0 0.0
    %501 = vmatpush1.msra.mxu0 0.0
    %502 = vmatprep.subr.mxu0 0.0
    %503 = vmatpush1.msra.mxu0 0.0
    %504 = vmatprep.subr.mxu0 0.0
    %505 = vmatpush1.msra.mxu0 0.0
    %506 = vmatprep.subr.mxu0 0.0
    %507 = vmatpush1.msra.mxu0 0.0
    %508 = vmatprep.mubr.f32.mxu0 0.0
    %509 = vmatmul.mubr.f32.gmra.mrb[0].mxu0 %v267
    %v510 = vpop.f32.mrb[0].mxu0
    %v511 = vadd.f32 %v442, %v510
    %v512 = vpop.f32.mrb[0].mxu0
    %513 = vmatprep.mubr.f32.mxu0 0.0
    %514 = vmatmul.mubr.f32.gmra.mrb[0].mxu0 %v270
    %v515 = vpop.f32.mrb[0].mxu0
    %v516 = vadd.f32 %v442, %v515
    %v517 = vpop.f32.mrb[0].mxu0
    %518 = vdwg.mxu0
    %v519 = vld [vmem:[%s12] sm:$0xff]
    %v520 = vld [vmem:[%s12 + $0x8] sm:$0xff]
    %v521 = vld [vmem:[%s12 + $0x10] sm:$0xff]
    %v522 = vld [vmem:[%s12 + $0x18] sm:$0xff]
    %v523 = vld [vmem:[%s13] sm:$0x1]
    %v525 = vlaneseq
    %v526 = vshrl.u32 %v525, 7
    %v527 = vsub.s32 0, %v526
    %v528 = vrot.slane %v523, %v527
    %v531 = vsel %vm83, %v73, 0
    %v534 = vsel %vm83, %v74, 0
    %536 = vmatprep.subr.mxu0 0.0
    %537 = vmatpush1.msra.mxu0 %v519
    %538 = vmatprep.subr.mxu0 0.0
    %539 = vmatpush1.msra.mxu0 %v520
    %540 = vmatprep.subr.mxu0 0.0
    %541 = vmatpush1.msra.mxu0 %v521
    %542 = vmatprep.subr.mxu0 0.0
    %543 = vmatpush1.msra.mxu0 %v522
    %544 = vmatprep.subr.mxu0 0.0
    %545 = vmatpush1.msra.mxu0 0.0
    %546 = vmatprep.subr.mxu0 0.0
    %547 = vmatpush1.msra.mxu0 0.0
    %548 = vmatprep.subr.mxu0 0.0
    %549 = vmatpush1.msra.mxu0 0.0
    %550 = vmatprep.subr.mxu0 0.0
    %551 = vmatpush1.msra.mxu0 0.0
    %552 = vmatprep.subr.mxu0 0.0
    %553 = vmatpush1.msra.mxu0 0.0
    %554 = vmatprep.subr.mxu0 0.0
    %555 = vmatpush1.msra.mxu0 0.0
    %556 = vmatprep.subr.mxu0 0.0
    %557 = vmatpush1.msra.mxu0 0.0
    %558 = vmatprep.subr.mxu0 0.0
    %559 = vmatpush1.msra.mxu0 0.0
    %560 = vmatprep.subr.mxu0 0.0
    %561 = vmatpush1.msra.mxu0 0.0
    %562 = vmatprep.subr.mxu0 0.0
    %563 = vmatpush1.msra.mxu0 0.0
    %564 = vmatprep.subr.mxu0 0.0
    %565 = vmatpush1.msra.mxu0 0.0
    %566 = vmatprep.subr.mxu0 0.0
    %567 = vmatpush1.msra.mxu0 0.0
    %568 = vmatprep.subr.mxu0 0.0
    %569 = vmatpush1.msra.mxu0 0.0
    %570 = vmatprep.subr.mxu0 0.0
    %571 = vmatpush1.msra.mxu0 0.0
    %572 = vmatprep.subr.mxu0 0.0
    %573 = vmatpush1.msra.mxu0 0.0
    %574 = vmatprep.subr.mxu0 0.0
    %575 = vmatpush1.msra.mxu0 0.0
    %576 = vmatprep.subr.mxu0 0.0
    %577 = vmatpush1.msra.mxu0 0.0
    %578 = vmatprep.subr.mxu0 0.0
    %579 = vmatpush1.msra.mxu0 0.0
    %580 = vmatprep.subr.mxu0 0.0
    %581 = vmatpush1.msra.mxu0 0.0
    %582 = vmatprep.subr.mxu0 0.0
    %583 = vmatpush1.msra.mxu0 0.0
    %584 = vmatprep.subr.mxu0 0.0
    %585 = vmatpush1.msra.mxu0 0.0
    %586 = vmatprep.subr.mxu0 0.0
    %587 = vmatpush1.msra.mxu0 0.0
    %588 = vmatprep.subr.mxu0 0.0
    %589 = vmatpush1.msra.mxu0 0.0
    %590 = vmatprep.subr.mxu0 0.0
    %591 = vmatpush1.msra.mxu0 0.0
    %592 = vmatprep.subr.mxu0 0.0
    %593 = vmatpush1.msra.mxu0 0.0
    %594 = vmatprep.subr.mxu0 0.0
    %595 = vmatpush1.msra.mxu0 0.0
    %596 = vmatprep.subr.mxu0 0.0
    %597 = vmatpush1.msra.mxu0 0.0
    %598 = vmatprep.subr.mxu0 0.0
    %599 = vmatpush1.msra.mxu0 0.0
    %600 = vmatprep.mubr.f32.mxu0 0.0
    %601 = vmatmul.mubr.f32.gmra.mrb[0].mxu0 %v531
    %v602 = vpop.f32.mrb[0].mxu0
    %v603 = vadd.f32 %v528, %v602
    %v604 = vpop.f32.mrb[0].mxu0
    %605 = vmatprep.mubr.f32.mxu0 0.0
    %606 = vmatmul.mubr.f32.gmra.mrb[0].mxu0 %v534
    %v607 = vpop.f32.mrb[0].mxu0
    %v608 = vadd.f32 %v528, %v607
    %v609 = vpop.f32.mrb[0].mxu0
    %610 = vdwg.mxu0
    %vm611 = vcmask 130048
    %612 = vst.msk [vmem:[#allocation2] sm:$0xff] %vm611, %v511
    %613 = vst.msk [vmem:[#allocation2 + $0x8] sm:$0xff] %vm611, %v516
    %614 = vst.msk [vmem:[#allocation4] sm:$0xff] %vm611, %v603
    %615 = vst.msk [vmem:[#allocation4 + $0x8] sm:$0xff] %vm611, %v608
    %v616 = vld [vmem:[%s14] sm:$0xff]
    %v617 = vld [vmem:[%s14 + $0x8] sm:$0xff]
    %v618 = vld [vmem:[%s15] sm:$0xff]
    %v619 = vld [vmem:[%s15 + $0x8] sm:$0xff]
    %v621 = vsel %vm611, %v603, 0
    %v624 = vsel %vm611, %v608, 0
    %626 = vmatprep.subr.mxu0 0.0
    %627 = vmatpush1.msra.mxu0 %v618
    %628 = vmatprep.subr.mxu0 0.0
    %629 = vmatpush1.msra.mxu0 %v619
    %630 = vmatprep.subr.mxu0 0.0
    %631 = vmatpush1.msra.mxu0 0.0
    %632 = vmatprep.subr.mxu0 0.0
    %633 = vmatpush1.msra.mxu0 0.0
    %634 = vmatprep.subr.mxu0 0.0
    %635 = vmatpush1.msra.mxu0 0.0
    %636 = vmatprep.subr.mxu0 0.0
    %637 = vmatpush1.msra.mxu0 0.0
    %638 = vmatprep.subr.mxu0 0.0
    %639 = vmatpush1.msra.mxu0 0.0
    %640 = vmatprep.subr.mxu0 0.0
    %641 = vmatpush1.msra.mxu0 0.0
    %642 = vmatprep.subr.mxu0 0.0
    %643 = vmatpush1.msra.mxu0 0.0
    %644 = vmatprep.subr.mxu0 0.0
    %645 = vmatpush1.msra.mxu0 0.0
    %646 = vmatprep.subr.mxu0 0.0
    %647 = vmatpush1.msra.mxu0 0.0
    %648 = vmatprep.subr.mxu0 0.0
    %649 = vmatpush1.msra.mxu0 0.0
    %650 = vmatprep.subr.mxu0 0.0
    %651 = vmatpush1.msra.mxu0 0.0
    %652 = vmatprep.subr.mxu0 0.0
    %653 = vmatpush1.msra.mxu0 0.0
    %654 = vmatprep.subr.mxu0 0.0
    %655 = vmatpush1.msra.mxu0 0.0
    %656 = vmatprep.subr.mxu0 0.0
    %657 = vmatpush1.msra.mxu0 0.0
    %658 = vmatprep.subr.mxu0 0.0
    %659 = vmatpush1.msra.mxu0 0.0
    %660 = vmatprep.subr.mxu0 0.0
    %661 = vmatpush1.msra.mxu0 0.0
    %662 = vmatprep.subr.mxu0 0.0
    %663 = vmatpush1.msra.mxu0 0.0
    %664 = vmatprep.subr.mxu0 0.0
    %665 = vmatpush1.msra.mxu0 0.0
    %666 = vmatprep.subr.mxu0 0.0
    %667 = vmatpush1.msra.mxu0 0.0
    %668 = vmatprep.subr.mxu0 0.0
    %669 = vmatpush1.msra.mxu0 0.0
    %670 = vmatprep.subr.mxu0 0.0
    %671 = vmatpush1.msra.mxu0 0.0
    %672 = vmatprep.subr.mxu0 0.0
    %673 = vmatpush1.msra.mxu0 0.0
    %674 = vmatprep.subr.mxu0 0.0
    %675 = vmatpush1.msra.mxu0 0.0
    %676 = vmatprep.subr.mxu0 0.0
    %677 = vmatpush1.msra.mxu0 0.0
    %678 = vmatprep.subr.mxu0 0.0
    %679 = vmatpush1.msra.mxu0 0.0
    %680 = vmatprep.subr.mxu0 0.0
    %681 = vmatpush1.msra.mxu0 0.0
    %682 = vmatprep.subr.mxu0 0.0
    %683 = vmatpush1.msra.mxu0 0.0
    %684 = vmatprep.subr.mxu0 0.0
    %685 = vmatpush1.msra.mxu0 0.0
    %686 = vmatprep.subr.mxu0 0.0
    %687 = vmatpush1.msra.mxu0 0.0
    %688 = vmatprep.subr.mxu0 0.0
    %689 = vmatpush1.msra.mxu0 0.0
    %690 = vmatprep.mubr.f32.mxu0 0.0
    %691 = vmatmul.mubr.f32.gmra.mrb[0].mxu0 %v621
    %v692 = vpop.f32.mrb[0].mxu0
    %v693 = vadd.f32 0.0, %v692
    %v694 = vpop.f32.mrb[0].mxu0
    %695 = vmatprep.mubr.f32.mxu0 0.0
    %696 = vmatmul.mubr.f32.gmra.mrb[0].mxu0 %v624
    %v697 = vpop.f32.mrb[0].mxu0
    %v698 = vadd.f32 0.0, %v697
    %v699 = vpop.f32.mrb[0].mxu0
    %700 = vdwg.mxu0
    %v702 = vsel %vm611, %v339, 0
    %v705 = vsel %vm611, %v344, 0
    %707 = vmatprep.subr.mxu0 0.0
    %708 = vmatpush1.msra.mxu0 %v616
    %709 = vmatprep.subr.mxu0 0.0
    %710 = vmatpush1.msra.mxu0 %v617
    %711 = vmatprep.subr.mxu0 0.0
    %712 = vmatpush1.msra.mxu0 0.0
    %713 = vmatprep.subr.mxu0 0.0
    %714 = vmatpush1.msra.mxu0 0.0
    %715 = vmatprep.subr.mxu0 0.0
    %716 = vmatpush1.msra.mxu0 0.0
    %717 = vmatprep.subr.mxu0 0.0
    %718 = vmatpush1.msra.mxu0 0.0
    %719 = vmatprep.subr.mxu0 0.0
    %720 = vmatpush1.msra.mxu0 0.0
    %721 = vmatprep.subr.mxu0 0.0
    %722 = vmatpush1.msra.mxu0 0.0
    %723 = vmatprep.subr.mxu0 0.0
    %724 = vmatpush1.msra.mxu0 0.0
    %725 = vmatprep.subr.mxu0 0.0
    %726 = vmatpush1.msra.mxu0 0.0
    %727 = vmatprep.subr.mxu0 0.0
    %728 = vmatpush1.msra.mxu0 0.0
    %729 = vmatprep.subr.mxu0 0.0
    %730 = vmatpush1.msra.mxu0 0.0
    %731 = vmatprep.subr.mxu0 0.0
    %732 = vmatpush1.msra.mxu0 0.0
    %733 = vmatprep.subr.mxu0 0.0
    %734 = vmatpush1.msra.mxu0 0.0
    %735 = vmatprep.subr.mxu0 0.0
    %736 = vmatpush1.msra.mxu0 0.0
    %737 = vmatprep.subr.mxu0 0.0
    %738 = vmatpush1.msra.mxu0 0.0
    %739 = vmatprep.subr.mxu0 0.0
    %740 = vmatpush1.msra.mxu0 0.0
    %741 = vmatprep.subr.mxu0 0.0
    %742 = vmatpush1.msra.mxu0 0.0
    %743 = vmatprep.subr.mxu0 0.0
    %744 = vmatpush1.msra.mxu0 0.0
    %745 = vmatprep.subr.mxu0 0.0
    %746 = vmatpush1.msra.mxu0 0.0
    %747 = vmatprep.subr.mxu0 0.0
    %748 = vmatpush1.msra.mxu0 0.0
    %749 = vmatprep.subr.mxu0 0.0
    %750 = vmatpush1.msra.mxu0 0.0
    %751 = vmatprep.subr.mxu0 0.0
    %752 = vmatpush1.msra.mxu0 0.0
    %753 = vmatprep.subr.mxu0 0.0
    %754 = vmatpush1.msra.mxu0 0.0
    %755 = vmatprep.subr.mxu0 0.0
    %756 = vmatpush1.msra.mxu0 0.0
    %757 = vmatprep.subr.mxu0 0.0
    %758 = vmatpush1.msra.mxu0 0.0
    %759 = vmatprep.subr.mxu0 0.0
    %760 = vmatpush1.msra.mxu0 0.0
    %761 = vmatprep.subr.mxu0 0.0
    %762 = vmatpush1.msra.mxu0 0.0
    %763 = vmatprep.subr.mxu0 0.0
    %764 = vmatpush1.msra.mxu0 0.0
    %765 = vmatprep.subr.mxu0 0.0
    %766 = vmatpush1.msra.mxu0 0.0
    %767 = vmatprep.subr.mxu0 0.0
    %768 = vmatpush1.msra.mxu0 0.0
    %769 = vmatprep.subr.mxu0 0.0
    %770 = vmatpush1.msra.mxu0 0.0
    %771 = vmatprep.mubr.f32.mxu0 0.0
    %772 = vmatmul.mubr.f32.gmra.mrb[0].mxu0 %v702
    %v773 = vpop.f32.mrb[0].mxu0
    %v774 = vadd.f32 %v693, %v773
    %v775 = vpop.f32.mrb[0].mxu0
    %776 = vmatprep.mubr.f32.mxu0 0.0
    %777 = vmatmul.mubr.f32.gmra.mrb[0].mxu0 %v705
    %v778 = vpop.f32.mrb[0].mxu0
    %v779 = vadd.f32 %v698, %v778
    %v780 = vpop.f32.mrb[0].mxu0
    %781 = vdwg.mxu0
    %vm782 = vcmask 31744
    %783 = vst.msk [vmem:[%s21] sm:$0xff] %vm782, %v774
    %784 = vst.msk [vmem:[%s21 + $0x8] sm:$0xff] %vm782, %v779
    %v785 = vld [vmem:[%s16] sm:$0xff]
    %v786 = vld [vmem:[%s16 + $0x8] sm:$0xff]
    %v787 = vld [vmem:[%s17] sm:$0xff]
    %v788 = vld [vmem:[%s17 + $0x8] sm:$0xff]
    %789 = vmatprep.subr.mxu0 0.0
    %790 = vmatpush1.msra.mxu0 %v787
    %791 = vmatprep.subr.mxu0 0.0
    %792 = vmatpush1.msra.mxu0 %v788
    %793 = vmatprep.subr.mxu0 0.0
    %794 = vmatpush1.msra.mxu0 0.0
    %795 = vmatprep.subr.mxu0 0.0
    %796 = vmatpush1.msra.mxu0 0.0
    %797 = vmatprep.subr.mxu0 0.0
    %798 = vmatpush1.msra.mxu0 0.0
    %799 = vmatprep.subr.mxu0 0.0
    %800 = vmatpush1.msra.mxu0 0.0
    %801 = vmatprep.subr.mxu0 0.0
    %802 = vmatpush1.msra.mxu0 0.0
    %803 = vmatprep.subr.mxu0 0.0
    %804 = vmatpush1.msra.mxu0 0.0
    %805 = vmatprep.subr.mxu0 0.0
    %806 = vmatpush1.msra.mxu0 0.0
    %807 = vmatprep.subr.mxu0 0.0
    %808 = vmatpush1.msra.mxu0 0.0
    %809 = vmatprep.subr.mxu0 0.0
    %810 = vmatpush1.msra.mxu0 0.0
    %811 = vmatprep.subr.mxu0 0.0
    %812 = vmatpush1.msra.mxu0 0.0
    %813 = vmatprep.subr.mxu0 0.0
    %814 = vmatpush1.msra.mxu0 0.0
    %815 = vmatprep.subr.mxu0 0.0
    %816 = vmatpush1.msra.mxu0 0.0
    %817 = vmatprep.subr.mxu0 0.0
    %818 = vmatpush1.msra.mxu0 0.0
    %819 = vmatprep.subr.mxu0 0.0
    %820 = vmatpush1.msra.mxu0 0.0
    %821 = vmatprep.subr.mxu0 0.0
    %822 = vmatpush1.msra.mxu0 0.0
    %823 = vmatprep.subr.mxu0 0.0
    %824 = vmatpush1.msra.mxu0 0.0
    %825 = vmatprep.subr.mxu0 0.0
    %826 = vmatpush1.msra.mxu0 0.0
    %827 = vmatprep.subr.mxu0 0.0
    %828 = vmatpush1.msra.mxu0 0.0
    %829 = vmatprep.subr.mxu0 0.0
    %830 = vmatpush1.msra.mxu0 0.0
    %831 = vmatprep.subr.mxu0 0.0
    %832 = vmatpush1.msra.mxu0 0.0
    %833 = vmatprep.subr.mxu0 0.0
    %834 = vmatpush1.msra.mxu0 0.0
    %835 = vmatprep.subr.mxu0 0.0
    %836 = vmatpush1.msra.mxu0 0.0
    %837 = vmatprep.subr.mxu0 0.0
    %838 = vmatpush1.msra.mxu0 0.0
    %839 = vmatprep.subr.mxu0 0.0
    %840 = vmatpush1.msra.mxu0 0.0
    %841 = vmatprep.subr.mxu0 0.0
    %842 = vmatpush1.msra.mxu0 0.0
    %843 = vmatprep.subr.mxu0 0.0
    %844 = vmatpush1.msra.mxu0 0.0
    %845 = vmatprep.subr.mxu0 0.0
    %846 = vmatpush1.msra.mxu0 0.0
    %847 = vmatprep.subr.mxu0 0.0
    %848 = vmatpush1.msra.mxu0 0.0
    %849 = vmatprep.subr.mxu0 0.0
    %850 = vmatpush1.msra.mxu0 0.0
    %851 = vmatprep.subr.mxu0 0.0
    %852 = vmatpush1.msra.mxu0 0.0
    %853 = vmatprep.mubr.f32.mxu0 0.0
    %854 = vmatmul.mubr.f32.gmra.mrb[0].mxu0 %v621
    %v855 = vpop.f32.mrb[0].mxu0
    %v856 = vadd.f32 0.0, %v855
    %v857 = vpop.f32.mrb[0].mxu0
    %858 = vmatprep.mubr.f32.mxu0 0.0
    %859 = vmatmul.mubr.f32.gmra.mrb[0].mxu0 %v624
    %v860 = vpop.f32.mrb[0].mxu0
    %v861 = vadd.f32 0.0, %v860
    %v862 = vpop.f32.mrb[0].mxu0
    %863 = vdwg.mxu0
    %v865 = vsel %vm611, %v425, 0
    %v868 = vsel %vm611, %v430, 0
    %870 = vmatprep.subr.mxu0 0.0
    %871 = vmatpush1.msra.mxu0 %v785
    %872 = vmatprep.subr.mxu0 0.0
    %873 = vmatpush1.msra.mxu0 %v786
    %874 = vmatprep.subr.mxu0 0.0
    %875 = vmatpush1.msra.mxu0 0.0
    %876 = vmatprep.subr.mxu0 0.0
    %877 = vmatpush1.msra.mxu0 0.0
    %878 = vmatprep.subr.mxu0 0.0
    %879 = vmatpush1.msra.mxu0 0.0
    %880 = vmatprep.subr.mxu0 0.0
    %881 = vmatpush1.msra.mxu0 0.0
    %882 = vmatprep.subr.mxu0 0.0
    %883 = vmatpush1.msra.mxu0 0.0
    %884 = vmatprep.subr.mxu0 0.0
    %885 = vmatpush1.msra.mxu0 0.0
    %886 = vmatprep.subr.mxu0 0.0
    %887 = vmatpush1.msra.mxu0 0.0
    %888 = vmatprep.subr.mxu0 0.0
    %889 = vmatpush1.msra.mxu0 0.0
    %890 = vmatprep.subr.mxu0 0.0
    %891 = vmatpush1.msra.mxu0 0.0
    %892 = vmatprep.subr.mxu0 0.0
    %893 = vmatpush1.msra.mxu0 0.0
    %894 = vmatprep.subr.mxu0 0.0
    %895 = vmatpush1.msra.mxu0 0.0
    %896 = vmatprep.subr.mxu0 0.0
    %897 = vmatpush1.msra.mxu0 0.0
    %898 = vmatprep.subr.mxu0 0.0
    %899 = vmatpush1.msra.mxu0 0.0
    %900 = vmatprep.subr.mxu0 0.0
    %901 = vmatpush1.msra.mxu0 0.0
    %902 = vmatprep.subr.mxu0 0.0
    %903 = vmatpush1.msra.mxu0 0.0
    %904 = vmatprep.subr.mxu0 0.0
    %905 = vmatpush1.msra.mxu0 0.0
    %906 = vmatprep.subr.mxu0 0.0
    %907 = vmatpush1.msra.mxu0 0.0
    %908 = vmatprep.subr.mxu0 0.0
    %909 = vmatpush1.msra.mxu0 0.0
    %910 = vmatprep.subr.mxu0 0.0
    %911 = vmatpush1.msra.mxu0 0.0
    %912 = vmatprep.subr.mxu0 0.0
    %913 = vmatpush1.msra.mxu0 0.0
    %914 = vmatprep.subr.mxu0 0.0
    %915 = vmatpush1.msra.mxu0 0.0
    %916 = vmatprep.subr.mxu0 0.0
    %917 = vmatpush1.msra.mxu0 0.0
    %918 = vmatprep.subr.mxu0 0.0
    %919 = vmatpush1.msra.mxu0 0.0
    %920 = vmatprep.subr.mxu0 0.0
    %921 = vmatpush1.msra.mxu0 0.0
    %922 = vmatprep.subr.mxu0 0.0
    %923 = vmatpush1.msra.mxu0 0.0
    %924 = vmatprep.subr.mxu0 0.0
    %925 = vmatpush1.msra.mxu0 0.0
    %926 = vmatprep.subr.mxu0 0.0
    %927 = vmatpush1.msra.mxu0 0.0
    %928 = vmatprep.subr.mxu0 0.0
    %929 = vmatpush1.msra.mxu0 0.0
    %930 = vmatprep.subr.mxu0 0.0
    %931 = vmatpush1.msra.mxu0 0.0
    %932 = vmatprep.subr.mxu0 0.0
    %933 = vmatpush1.msra.mxu0 0.0
    %934 = vmatprep.mubr.f32.mxu0 0.0
    %935 = vmatmul.mubr.f32.gmra.mrb[0].mxu0 %v865
    %v936 = vpop.f32.mrb[0].mxu0
    %v937 = vadd.f32 %v856, %v936
    %v938 = vpop.f32.mrb[0].mxu0
    %939 = vmatprep.mubr.f32.mxu0 0.0
    %940 = vmatmul.mubr.f32.gmra.mrb[0].mxu0 %v868
    %v941 = vpop.f32.mrb[0].mxu0
    %v942 = vadd.f32 %v861, %v941
    %v943 = vpop.f32.mrb[0].mxu0
    %944 = vdwg.mxu0
    %945 = vst.msk [vmem:[%s22] sm:$0xff] %vm782, %v937
    %946 = vst.msk [vmem:[%s22 + $0x8] sm:$0xff] %vm782, %v942
    %v947 = vld [vmem:[%s18] sm:$0xff]
    %v948 = vld [vmem:[%s18 + $0x8] sm:$0xff]
    %v949 = vld [vmem:[%s18 + $0x10] sm:$0xff]
    %v950 = vld [vmem:[%s18 + $0x18] sm:$0xff]
    %951 = vmatprep.subr.mxu0 0.0
    %952 = vmatpush1.msra.mxu0 %v947
    %953 = vmatprep.subr.mxu0 0.0
    %954 = vmatpush1.msra.mxu0 %v948
    %955 = vmatprep.subr.mxu0 0.0
    %956 = vmatpush1.msra.mxu0 %v949
    %957 = vmatprep.subr.mxu0 0.0
    %958 = vmatpush1.msra.mxu0 %v950
    %959 = vmatprep.subr.mxu0 0.0
    %960 = vmatpush1.msra.mxu0 0.0
    %961 = vmatprep.subr.mxu0 0.0
    %962 = vmatpush1.msra.mxu0 0.0
    %963 = vmatprep.subr.mxu0 0.0
    %964 = vmatpush1.msra.mxu0 0.0
    %965 = vmatprep.subr.mxu0 0.0
    %966 = vmatpush1.msra.mxu0 0.0
    %967 = vmatprep.subr.mxu0 0.0
    %968 = vmatpush1.msra.mxu0 0.0
    %969 = vmatprep.subr.mxu0 0.0
    %970 = vmatpush1.msra.mxu0 0.0
    %971 = vmatprep.subr.mxu0 0.0
    %972 = vmatpush1.msra.mxu0 0.0
    %973 = vmatprep.subr.mxu0 0.0
    %974 = vmatpush1.msra.mxu0 0.0
    %975 = vmatprep.subr.mxu0 0.0
    %976 = vmatpush1.msra.mxu0 0.0
    %977 = vmatprep.subr.mxu0 0.0
    %978 = vmatpush1.msra.mxu0 0.0
    %979 = vmatprep.subr.mxu0 0.0
    %980 = vmatpush1.msra.mxu0 0.0
    %981 = vmatprep.subr.mxu0 0.0
    %982 = vmatpush1.msra.mxu0 0.0
    %983 = vmatprep.subr.mxu0 0.0
    %984 = vmatpush1.msra.mxu0 0.0
    %985 = vmatprep.subr.mxu0 0.0
    %986 = vmatpush1.msra.mxu0 0.0
    %987 = vmatprep.subr.mxu0 0.0
    %988 = vmatpush1.msra.mxu0 0.0
    %989 = vmatprep.subr.mxu0 0.0
    %990 = vmatpush1.msra.mxu0 0.0
    %991 = vmatprep.subr.mxu0 0.0
    %992 = vmatpush1.msra.mxu0 0.0
    %993 = vmatprep.subr.mxu0 0.0
    %994 = vmatpush1.msra.mxu0 0.0
    %995 = vmatprep.subr.mxu0 0.0
    %996 = vmatpush1.msra.mxu0 0.0
    %997 = vmatprep.subr.mxu0 0.0
    %998 = vmatpush1.msra.mxu0 0.0
    %999 = vmatprep.subr.mxu0 0.0
    %1000 = vmatpush1.msra.mxu0 0.0
    %1001 = vmatprep.subr.mxu0 0.0
    %1002 = vmatpush1.msra.mxu0 0.0
    %1003 = vmatprep.subr.mxu0 0.0
    %1004 = vmatpush1.msra.mxu0 0.0
    %1005 = vmatprep.subr.mxu0 0.0
    %1006 = vmatpush1.msra.mxu0 0.0
    %1007 = vmatprep.subr.mxu0 0.0
    %1008 = vmatpush1.msra.mxu0 0.0
    %1009 = vmatprep.subr.mxu0 0.0
    %1010 = vmatpush1.msra.mxu0 0.0
    %1011 = vmatprep.subr.mxu0 0.0
    %1012 = vmatpush1.msra.mxu0 0.0
    %1013 = vmatprep.subr.mxu0 0.0
    %1014 = vmatpush1.msra.mxu0 0.0
    %1015 = vmatprep.mubr.f32.mxu0 0.0
    %1016 = vmatmul.mubr.f32.gmra.mrb[0].mxu0 %v531
    %v1017 = vpop.f32.mrb[0].mxu0
    %v1018 = vadd.f32 0.0, %v1017
    %v1019 = vpop.f32.mrb[0].mxu0
    %1020 = vmatprep.mubr.f32.mxu0 0.0
    %1021 = vmatmul.mubr.f32.gmra.mrb[0].mxu0 %v534
    %v1022 = vpop.f32.mrb[0].mxu0
    %v1023 = vadd.f32 0.0, %v1022
    %v1024 = vpop.f32.mrb[0].mxu0
    %1025 = vdwg.mxu0
    %1026 = vst.msk [vmem:[%s23] sm:$0xff] %vm782, %v1018
    %1027 = vst.msk [vmem:[%s23 + $0x8] sm:$0xff] %vm782, %v1023
    // Predicated region
    $region78: #{tpu_custom_call.1} parent=1 // pred_check
      _
    $region79: #{tpu_custom_call.1} parent=1 // pred_check_branch
      %1029 = sbr.rel (0) target = $region81
    $region80: #{tpu_custom_call.1} parent=1 // pred_region
      %s1031 = ssub.s32 256, 256
      %1032 = vsyncadd [#allocation3], %s1031
      %s1033 = sshll.u32 [#allocation2], 4
      %s1034 = int_to_ptr.vmem [resolvable:$true] %s1033
      %1039 = dma.vmem_to_hbm [thread:$0]  %s1034, 256, %s19, [#allocation3], 128, 128, 8
    $region81: #{tpu_custom_call.1} parent=1 // pred_fallthru
      _
    // Predicated region
    $region82: #{tpu_custom_call.1} parent=1 // pred_check
      _
    $region83: #{tpu_custom_call.1} parent=1 // pred_check_branch
      %1041 = sbr.rel (0) target = $region85
    $region84: #{tpu_custom_call.1} parent=1 // pred_region
      %s1043 = ssub.s32 256, 256
      %1044 = vsyncadd [#allocation5], %s1043
      %s1045 = sshll.u32 [#allocation4], 4
      %s1046 = int_to_ptr.vmem [resolvable:$true] %s1045
      %1051 = dma.vmem_to_hbm [thread:$0]  %s1046, 256, %s20, [#allocation5], 128, 128, 8
    $region85: #{tpu_custom_call.1} parent=1 // pred_fallthru
      _
    // Predicated region
    $region86: #{tpu_custom_call.1} parent=1 // pred_check
      _
    $region87: #{tpu_custom_call.1} parent=1 // pred_check_branch
      %1053 = sbr.rel (0) target = $region89
    $region88: #{tpu_custom_call.1} parent=1 // pred_region
      _
    $region89: #{tpu_custom_call.1} parent=1 // pred_fallthru
      _
    // Predicated region
    $region90: #{tpu_custom_call.1} parent=1 // pred_check
      _
    $region91: #{tpu_custom_call.1} parent=1 // pred_check_branch
      %1055 = sbr.rel (0) target = $region93
    $region92: #{tpu_custom_call.1} parent=1 // pred_region
      _
    $region93: #{tpu_custom_call.1} parent=1 // pred_fallthru
      _
    // Predicated region
    $region94: #{tpu_custom_call.1} parent=1 // pred_check
      _
    $region95: #{tpu_custom_call.1} parent=1 // pred_check_branch
      %1057 = sbr.rel (0) target = $region97
    $region96: #{tpu_custom_call.1} parent=1 // pred_region
      _
    $region97: #{tpu_custom_call.1} parent=1 // pred_fallthru
      _
    // Predicated region
    $region98: #{tpu_custom_call.1} parent=1 // pred_check
      _
    $region99: #{tpu_custom_call.1} parent=1 // pred_check_branch
      %1059 = sbr.rel (0) target = $region101
    $region100: #{tpu_custom_call.1} parent=1 // pred_region
      %1060 = dma.done [#allocation3], 256
    $region101: #{tpu_custom_call.1} parent=1 // pred_fallthru
      _
    // Predicated region
    $region102: #{tpu_custom_call.1} parent=1 // pred_check
      _
    $region103: #{tpu_custom_call.1} parent=1 // pred_check_branch
      %1062 = sbr.rel (0) target = $region105
    $region104: #{tpu_custom_call.1} parent=1 // pred_region
      %1063 = dma.done [#allocation5], 256
    $region105: #{tpu_custom_call.1} parent=1 // pred_fallthru
      _
    // Predicated region
    $region106: #{tpu_custom_call.1} parent=1 // pred_check
      _
    $region107: #{tpu_custom_call.1} parent=1 // pred_check_branch
      %1065 = sbr.rel (0) target = $region109
    $region108: #{tpu_custom_call.1} parent=1 // pred_region
      _
    $region109: #{tpu_custom_call.1} parent=1 // pred_fallthru
      _
    // Predicated region
    $region110: #{tpu_custom_call.1} parent=1 // pred_check
      _
    $region111: #{tpu_custom_call.1} parent=1 // pred_check_branch
      %1067 = sbr.rel (0) target = $region113
    $region112: #{tpu_custom_call.1} parent=1 // pred_region
      _
    $region113: #{tpu_custom_call.1} parent=1 // pred_fallthru
      _
    // Predicated region
    $region114: #{tpu_custom_call.1} parent=1 // pred_check
      _
    $region115: #{tpu_custom_call.1} parent=1 // pred_check_branch
      %1069 = sbr.rel (0) target = $region117
    $region116: #{tpu_custom_call.1} parent=1 // pred_region
      _
    $region117: #{tpu_custom_call.1} parent=1 // pred_fallthru
      _
    %1070 = vsyncpa [#allocation3], 1
    %1071 = vsyncpa [#allocation5], 1

</llo_original>
